<compile_context>
chip_gen: v6e
topology: v6e:2x2x1
jax: 0.10.0
libtpu: 0.0.40
codegen_flags: <defaults>
</compile_context>

<pallas_src>
import functools

import jax
import jax.numpy as jnp
from jax.experimental import pallas as pl
from jax.experimental.pallas import tpu as pltpu


def agcrn_cell_kernel(x_ref, st_ref, s_ref, wxg_ref, wsg_ref, wxu_ref,
                      wsu_ref, ex_ref, es_ref, bg_ref, bu_ref, h_ref,
                      *, Bt, N, Ci, Co, K, D):
    """One batch tile (Bt elements) of the adaptive-graph GRU cell."""
    f32, bf16 = jnp.float32, jnp.bfloat16
    Km1 = K - 1

    # Per-batch [N, C] views via leading-dim indexing (no in-kernel reshapes).
    x_pieces = [x_ref[b] for b in range(Bt)]        # Bt x [N, Ci]
    st_pieces = [st_ref[b] for b in range(Bt)]      # Bt x [N, Co]
    x_rows = x_pieces[0] if Bt == 1 else jnp.concatenate(x_pieces, axis=0)
    st_rows = st_pieces[0] if Bt == 1 else jnp.concatenate(st_pieces, axis=0)

    s_all = s_ref[...] if Km1 > 0 else None         # [(K-1)*N, N] bf16 supports

    def cheb_features(pieces, v_rows, C):
        # -> [Bt*N, K*C] = [v | S_1 v | ... | S_{K-1} v]  (row-stacked batches)
        # k = 0 identity support is the raw input: no eye, no matmul.
        if Km1 == 0:
            return v_rows
        # All non-identity supports applied in ONE matmul, batches on lanes.
        v_lane = (pieces[0] if Bt == 1
                  else jnp.concatenate(pieces, axis=1)).astype(bf16)  # [N, Bt*C]
        sv = jnp.dot(s_all, v_lane, preferred_element_type=f32)       # [(K-1)*N, Bt*C]
        cols = [v_rows]
        for k in range(Km1):
            blk = sv[k * N:(k + 1) * N]                               # [N, Bt*C]
            if Bt == 1:
                cols.append(blk)
            else:
                cols.append(jnp.concatenate(
                    [blk[:, b * C:(b + 1) * C] for b in range(Bt)], axis=0))
        return jnp.concatenate(cols, axis=1)

    def fold_emb(g, e_rep):
        # y[:, d*(K*C) + j] = emb[n, d] * g[:, j]  (per-row outer product);
        # bf16 so the weight contraction runs at MXU bf16 rate w/ f32 accum.
        return (jnp.concatenate([g] * D, axis=1) * e_rep).astype(bf16)

    ex = ex_ref[...]                                 # [Bt*N, D*K*Ci] f32
    es = es_ref[...]                                 # [Bt*N, D*K*Co] f32
    bg = bg_ref[...]                                 # [Bt*N, 2*Co]   f32
    bu = bu_ref[...]                                 # [Bt*N, Co]     f32

    # Graph features; x features shared by gate and candidate convs.
    gx = cheb_features(x_pieces, x_rows, Ci)         # [Bt*N, K*Ci] f32
    gs = cheb_features(st_pieces, st_rows, Co)       # [Bt*N, K*Co] f32
    yx = fold_emb(gx, ex)                            # [Bt*N, D*K*Ci] bf16
    ys = fold_emb(gs, es)                            # [Bt*N, D*K*Co] bf16

    # ---- gate: z_r = sigmoid(AVWGCN([x, state])) ----
    zr = jax.nn.sigmoid(
        jnp.dot(yx, wxg_ref[...], preferred_element_type=f32)
        + jnp.dot(ys, wsg_ref[...], preferred_element_type=f32) + bg)  # [Bt*N, 2Co]
    z = zr[:, :Co]
    r = zr[:, Co:]

    # ---- candidate: hc = tanh(AVWGCN([x, z*state])) ----
    zs_rows = z * st_rows
    zs_pieces = ([zs_rows] if Bt == 1 else
                 [zs_rows[b * N:(b + 1) * N] for b in range(Bt)])
    gzs = cheb_features(zs_pieces, zs_rows, Co)      # [Bt*N, K*Co]
    yzs = fold_emb(gzs, es)
    hc = jnp.tanh(
        jnp.dot(yx, wxu_ref[...], preferred_element_type=f32)
        + jnp.dot(yzs, wsu_ref[...], preferred_element_type=f32) + bu)

    h = r * st_rows + (1.0 - r) * hc                 # [Bt*N, Co]
    for b in range(Bt):
        h_ref[b] = h[b * N:(b + 1) * N]


def _pick_batch_tile(B, N, max_rows=512):
    """Largest divisor of B keeping roughly <= max_rows matmul rows per step."""
    best = 1
    for bt in range(1, B + 1):
        if B % bt == 0 and bt * N <= max(max_rows, N):
            best = bt
    return best


def agcrn_cell_forward(x, state, node_embeddings, params):
    """AGCRNCell.forward.  x: [B,N,Ci], state: [B,N,Co], emb: [N,D]."""
    B, N, Ci = x.shape
    Co = state.shape[-1]
    D = node_embeddings.shape[-1]
    wg, bgp = params["gate_w"], params["gate_b"]       # [D,K,Ci+Co,2Co], [D,2Co]
    wu, bup = params["update_w"], params["update_b"]   # [D,K,Ci+Co, Co], [D, Co]
    K = wg.shape[1]

    x = x.astype(jnp.float32)
    state = state.astype(jnp.float32)
    emb = node_embeddings.astype(jnp.float32)

    # ---- batch-invariant precompute (plain-JAX glue, hoisted out of grid) ----
    A = jax.nn.softmax(jax.nn.relu(emb @ emb.T), axis=1)             # [N, N]
    sup = [jnp.eye(N, dtype=jnp.float32), A]
    for _ in range(2, K):
        sup.append(2.0 * A @ sup[-1] - sup[-2])
    if K > 1:
        s_all = jnp.concatenate(sup[1:K], axis=0)                    # [(K-1)*N, N]
    else:
        s_all = jnp.zeros((N, N), jnp.float32)                       # unused dummy
    s_all = s_all.astype(jnp.bfloat16)

    # weights_pool re-pack: [D,K,Cin,Cout] -> x-half / state-half, each
    # [D*K*C, Cout]; the embed-dim (d) reduction is folded into the features
    # via a per-row outer product inside the kernel.
    def pack(w, lo, hi):
        ws = w[:, :, lo:hi, :]                                       # [D,K,C,Cout]
        d, k, c, co = ws.shape
        return ws.reshape(d * k * c, co)

    wxg = pack(wg, 0, Ci).astype(jnp.bfloat16)          # [D*K*Ci, 2Co]
    wsg = pack(wg, Ci, Ci + Co).astype(jnp.bfloat16)    # [D*K*Co, 2Co]
    wxu = pack(wu, 0, Ci).astype(jnp.bfloat16)          # [D*K*Ci,  Co]
    wsu = pack(wu, Ci, Ci + Co).astype(jnp.bfloat16)    # [D*K*Co,  Co]

    Bt = _pick_batch_tile(B, N)
    grid = (B // Bt,)

    # Per-node constant tables, pre-tiled to the batch tile (resident in VMEM,
    # constant index_map -> DMA'd once; no per-step concats inside the kernel).
    erx = jnp.tile(jnp.repeat(emb, K * Ci, axis=1), (Bt, 1))   # [Bt*N, D*K*Ci]
    ers = jnp.tile(jnp.repeat(emb, K * Co, axis=1), (Bt, 1))   # [Bt*N, D*K*Co]
    bgn = jnp.tile(emb @ bgp, (Bt, 1))                         # [Bt*N, 2Co]
    bun = jnp.tile(emb @ bup, (Bt, 1))                         # [Bt*N, Co]

    kernel = functools.partial(agcrn_cell_kernel,
                               Bt=Bt, N=N, Ci=Ci, Co=Co, K=K, D=D)

    def const(arr):
        return pl.BlockSpec(arr.shape, lambda b: (0, 0))

    # TODO(synk): for graphs with hundreds+ nodes, node-tile the [(K-1)*N, N]
    # supports (or keep them in HBM via memory_space=pl.ANY + manual DMA) and
    # set vmem_limit_bytes — v7x has only 64 MiB VMEM per TensorCore.
    return pl.pallas_call(
        kernel,
        out_shape=jax.ShapeDtypeStruct((B, N, Co), jnp.float32),
        grid=grid,
        in_specs=[
            pl.BlockSpec((Bt, N, Ci), lambda b: (b, 0, 0)),
            pl.BlockSpec((Bt, N, Co), lambda b: (b, 0, 0)),
            const(s_all),
            const(wxg), const(wsg), const(wxu), const(wsu),
            const(erx), const(ers), const(bgn), const(bun),
        ],
        out_specs=pl.BlockSpec((Bt, N, Co), lambda b: (b, 0, 0)),
        compiler_params=pltpu.CompilerParams(
            dimension_semantics=("parallel",)),
    )(x, state, s_all, wxg, wsg, wxu, wsu, erx, ers, bgn, bun)


# ---------------- pure-JAX reference (mirrors the PyTorch module) -----------
def _avwgcn_ref(x, emb, wp, bp, cheb_k):
    N = emb.shape[0]
    supports = jax.nn.softmax(jax.nn.relu(emb @ emb.T), axis=1)
    support_set = [jnp.eye(N, dtype=x.dtype), supports]
    for _ in range(2, cheb_k):
        support_set.append(2 * supports @ support_set[-1] - support_set[-2])
    supports = jnp.stack(support_set[:cheb_k], axis=0)
    weights = jnp.einsum("nd,dkio->nkio", emb, wp)
    bias = emb @ bp
    x_g = jnp.einsum("knm,bmc->bknc", supports, x)
    x_g = jnp.transpose(x_g, (0, 2, 1, 3))
    return jnp.einsum("bnki,nkio->bno", x_g, weights) + bias


def _agcrn_cell_ref(x, state, emb, params, cheb_k):
    hd = state.shape[-1]
    inp = jnp.concatenate([x, state], axis=-1)
    z_r = jax.nn.sigmoid(
        _avwgcn_ref(inp, emb, params["gate_w"], params["gate_b"], cheb_k))
    z, r = z_r[..., :hd], z_r[..., hd:]
    cand = jnp.concatenate([x, z * state], axis=-1)
    hc = jnp.tanh(
        _avwgcn_ref(cand, emb, params["update_w"], params["update_b"], cheb_k))
    return r * state + (1.0 - r) * hc


if __name__ == "__main__":
    B, N, Ci, Co, K, D = 2, 16, 4, 32, 2, 8   # batch, nodes, dim_in, dim_out, cheb_k, embed_dim
    key = jax.random.PRNGKey(0)
    ks = jax.random.split(key, 7)
    x = jax.random.normal(ks[0], (B, N, Ci), jnp.float32)
    state = jax.random.normal(ks[1], (B, N, Co), jnp.float32)
    emb = jax.random.normal(ks[2], (N, D), jnp.float32)
    scale = 0.1
    params = {
        "gate_w":   scale * jax.random.normal(ks[3], (D, K, Ci + Co, 2 * Co), jnp.float32),
        "gate_b":   scale * jax.random.normal(ks[4], (D, 2 * Co), jnp.float32),
        "update_w": scale * jax.random.normal(ks[5], (D, K, Ci + Co, Co), jnp.float32),
        "update_b": scale * jax.random.normal(ks[6], (D, Co), jnp.float32),
    }

    h = jax.block_until_ready(agcrn_cell_forward(x, state, emb, params))
    h_ref = _agcrn_cell_ref(x, state, emb, params, K)

    assert h.shape == (B, N, Co)
    # MXU operands are bf16 (f32 accumulation) per the v6e/v7x guidance; the
    # tolerance below is the expected bf16-rounding envelope for this depth of
    # contraction (D*K*(Ci+Co) terms), slightly looser than pure f32.
    max_err = float(jnp.max(jnp.abs(h - h_ref)))
    assert jnp.allclose(h, h_ref, atol=2.5e-2, rtol=2.5e-2), max_err
    print("KERNEL_OK")
</pallas_src>

<mosaic_0001>
module attributes {stable_mosaic.version = 11 : i64} {
  func.func @agcrn_cell_kernel(%arg0: i32, %arg1: memref<2x16x4xf32, #tpu.memory_space<vmem>>, %arg2: memref<2x16x32xf32, #tpu.memory_space<vmem>>, %arg3: memref<16x16xbf16, #tpu.memory_space<vmem>>, %arg4: memref<64x64xbf16, #tpu.memory_space<vmem>>, %arg5: memref<512x64xbf16, #tpu.memory_space<vmem>>, %arg6: memref<64x32xbf16, #tpu.memory_space<vmem>>, %arg7: memref<512x32xbf16, #tpu.memory_space<vmem>>, %arg8: memref<32x64xf32, #tpu.memory_space<vmem>>, %arg9: memref<32x512xf32, #tpu.memory_space<vmem>>, %arg10: memref<32x64xf32, #tpu.memory_space<vmem>>, %arg11: memref<32x32xf32, #tpu.memory_space<vmem>>, %arg12: memref<2x16x32xf32, #tpu.memory_space<vmem>>) attributes {dimension_semantics = [#tpu.dimension_semantics<parallel>], iteration_bounds = array<i64: 1>, scalar_prefetch = 0 : i64, scratch_operands = 0 : i64, tpu.core_type = #tpu.core_type<tc>, window_params = [{transform_indices = @transform_0, window_bounds = array<i64: 2, 16, 4>}, {transform_indices = @transform_1, window_bounds = array<i64: 2, 16, 32>}, {pipeline_mode = #tpu.pipeline_mode<synchronous>, transform_indices = @transform_2, window_bounds = array<i64: 16, 16>}, {pipeline_mode = #tpu.pipeline_mode<synchronous>, transform_indices = @transform_3, window_bounds = array<i64: 64, 64>}, {pipeline_mode = #tpu.pipeline_mode<synchronous>, transform_indices = @transform_4, window_bounds = array<i64: 512, 64>}, {pipeline_mode = #tpu.pipeline_mode<synchronous>, transform_indices = @transform_5, window_bounds = array<i64: 64, 32>}, {pipeline_mode = #tpu.pipeline_mode<synchronous>, transform_indices = @transform_6, window_bounds = array<i64: 512, 32>}, {pipeline_mode = #tpu.pipeline_mode<synchronous>, transform_indices = @transform_7, window_bounds = array<i64: 32, 64>}, {pipeline_mode = #tpu.pipeline_mode<synchronous>, transform_indices = @transform_8, window_bounds = array<i64: 32, 512>}, {pipeline_mode = #tpu.pipeline_mode<synchronous>, transform_indices = @transform_9, window_bounds = array<i64: 32, 64>}, {pipeline_mode = #tpu.pipeline_mode<synchronous>, transform_indices = @transform_10, window_bounds = array<i64: 32, 32>}, {transform_indices = @transform_11, window_bounds = array<i64: 2, 16, 32>}]} {
    %c0 = arith.constant 0 : index
    %c0_0 = arith.constant 0 : index
    %c0_1 = arith.constant 0 : index
    %0 = vector.load %arg1[%c0, %c0_0, %c0_1] : memref<2x16x4xf32, #tpu.memory_space<vmem>>, vector<1x16x4xf32>
    %1 = vector.shape_cast %0 : vector<1x16x4xf32> to vector<16x4xf32>
    %c1 = arith.constant 1 : index
    %c0_2 = arith.constant 0 : index
    %c0_3 = arith.constant 0 : index
    %2 = vector.load %arg1[%c1, %c0_2, %c0_3] : memref<2x16x4xf32, #tpu.memory_space<vmem>>, vector<1x16x4xf32>
    %3 = vector.shape_cast %2 : vector<1x16x4xf32> to vector<16x4xf32>
    %c0_4 = arith.constant 0 : index
    %c0_5 = arith.constant 0 : index
    %c0_6 = arith.constant 0 : index
    %4 = vector.load %arg2[%c0_4, %c0_5, %c0_6] : memref<2x16x32xf32, #tpu.memory_space<vmem>>, vector<1x16x32xf32>
    %5 = vector.shape_cast %4 : vector<1x16x32xf32> to vector<16x32xf32>
    %c1_7 = arith.constant 1 : index
    %c0_8 = arith.constant 0 : index
    %c0_9 = arith.constant 0 : index
    %6 = vector.load %arg2[%c1_7, %c0_8, %c0_9] : memref<2x16x32xf32, #tpu.memory_space<vmem>>, vector<1x16x32xf32>
    %7 = vector.shape_cast %6 : vector<1x16x32xf32> to vector<16x32xf32>
    %8 = tpu.concatenate %1, %3 in 0 : vector<16x4xf32>, vector<16x4xf32> -> vector<32x4xf32>
    %9 = tpu.concatenate %5, %7 in 0 : vector<16x32xf32>, vector<16x32xf32> -> vector<32x32xf32>
    %c0_10 = arith.constant 0 : index
    %c0_11 = arith.constant 0 : index
    %10 = vector.load %arg3[%c0_10, %c0_11] : memref<16x16xbf16, #tpu.memory_space<vmem>>, vector<16x16xbf16>
    %c0_12 = arith.constant 0 : index
    %c0_13 = arith.constant 0 : index
    %11 = vector.load %arg8[%c0_12, %c0_13] : memref<32x64xf32, #tpu.memory_space<vmem>>, vector<32x64xf32>
    %c0_14 = arith.constant 0 : index
    %c0_15 = arith.constant 0 : index
    %12 = vector.load %arg9[%c0_14, %c0_15] : memref<32x512xf32, #tpu.memory_space<vmem>>, vector<32x512xf32>
    %c0_16 = arith.constant 0 : index
    %c0_17 = arith.constant 0 : index
    %13 = vector.load %arg10[%c0_16, %c0_17] : memref<32x64xf32, #tpu.memory_space<vmem>>, vector<32x64xf32>
    %c0_18 = arith.constant 0 : index
    %c0_19 = arith.constant 0 : index
    %14 = vector.load %arg11[%c0_18, %c0_19] : memref<32x32xf32, #tpu.memory_space<vmem>>, vector<32x32xf32>
    %15 = tpu.concatenate %1, %3 in 1 : vector<16x4xf32>, vector<16x4xf32> -> vector<16x8xf32>
    %16 = arith.truncf %15 : vector<16x8xf32> to vector<16x8xbf16>
    %cst = arith.constant dense<0.000000e+00> : vector<16x8xf32>
    %17 = tpu.matmul %10, %16, %cst {dimension_numbers = #tpu.dot_dimension_numbers<[1], [0], [0], [1], [0, 0, 1, 1], [], []>} : vector<16x16xbf16>, vector<16x8xbf16>, vector<16x8xf32> -> vector<16x8xf32>
    %18 = vector.extract_strided_slice %17 {offsets = [0, 0], sizes = [16, 4], strides = [1, 1]} : vector<16x8xf32> to vector<16x4xf32>
    %19 = vector.extract_strided_slice %17 {offsets = [0, 4], sizes = [16, 4], strides = [1, 1]} : vector<16x8xf32> to vector<16x4xf32>
    %20 = tpu.concatenate %18, %19 in 0 : vector<16x4xf32>, vector<16x4xf32> -> vector<32x4xf32>
    %21 = tpu.concatenate %8, %20 in 1 : vector<32x4xf32>, vector<32x4xf32> -> vector<32x8xf32>
    %22 = tpu.concatenate %5, %7 in 1 : vector<16x32xf32>, vector<16x32xf32> -> vector<16x64xf32>
    %23 = arith.truncf %22 : vector<16x64xf32> to vector<16x64xbf16>
    %cst_20 = arith.constant dense<0.000000e+00> : vector<16x64xf32>
    %24 = tpu.matmul %10, %23, %cst_20 {dimension_numbers = #tpu.dot_dimension_numbers<[1], [0], [0], [1], [0, 0, 1, 1], [], []>} : vector<16x16xbf16>, vector<16x64xbf16>, vector<16x64xf32> -> vector<16x64xf32>
    %25 = vector.extract_strided_slice %24 {offsets = [0, 0], sizes = [16, 32], strides = [1, 1]} : vector<16x64xf32> to vector<16x32xf32>
    %26 = vector.extract_strided_slice %24 {offsets = [0, 32], sizes = [16, 32], strides = [1, 1]} : vector<16x64xf32> to vector<16x32xf32>
    %27 = tpu.concatenate %25, %26 in 0 : vector<16x32xf32>, vector<16x32xf32> -> vector<32x32xf32>
    %28 = tpu.concatenate %9, %27 in 1 : vector<32x32xf32>, vector<32x32xf32> -> vector<32x64xf32>
    %29 = tpu.concatenate %21, %21, %21, %21, %21, %21, %21, %21 in 1 : vector<32x8xf32>, vector<32x8xf32>, vector<32x8xf32>, vector<32x8xf32>, vector<32x8xf32>, vector<32x8xf32>, vector<32x8xf32>, vector<32x8xf32> -> vector<32x64xf32>
    %30 = arith.mulf %29, %11 : vector<32x64xf32>
    %31 = arith.truncf %30 : vector<32x64xf32> to vector<32x64xbf16>
    %32 = tpu.concatenate %28, %28, %28, %28, %28, %28, %28, %28 in 1 : vector<32x64xf32>, vector<32x64xf32>, vector<32x64xf32>, vector<32x64xf32>, vector<32x64xf32>, vector<32x64xf32>, vector<32x64xf32>, vector<32x64xf32> -> vector<32x512xf32>
    %33 = arith.mulf %32, %12 : vector<32x512xf32>
    %34 = arith.truncf %33 : vector<32x512xf32> to vector<32x512xbf16>
    %c0_21 = arith.constant 0 : index
    %c0_22 = arith.constant 0 : index
    %35 = vector.load %arg4[%c0_21, %c0_22] : memref<64x64xbf16, #tpu.memory_space<vmem>>, vector<64x64xbf16>
    %cst_23 = arith.constant dense<0.000000e+00> : vector<32x64xf32>
    %36 = tpu.matmul %31, %35, %cst_23 {dimension_numbers = #tpu.dot_dimension_numbers<[1], [0], [0], [1], [0, 0, 1, 1], [], []>} : vector<32x64xbf16>, vector<64x64xbf16>, vector<32x64xf32> -> vector<32x64xf32>
    %c0_24 = arith.constant 0 : index
    %c0_25 = arith.constant 0 : index
    %37 = vector.load %arg5[%c0_24, %c0_25] : memref<512x64xbf16, #tpu.memory_space<vmem>>, vector<512x64xbf16>
    %cst_26 = arith.constant dense<0.000000e+00> : vector<32x64xf32>
    %38 = tpu.matmul %34, %37, %cst_26 {dimension_numbers = #tpu.dot_dimension_numbers<[1], [0], [0], [1], [0, 0, 1, 1], [], []>} : vector<32x512xbf16>, vector<512x64xbf16>, vector<32x64xf32> -> vector<32x64xf32>
    %39 = arith.addf %36, %38 : vector<32x64xf32>
    %40 = arith.addf %39, %13 : vector<32x64xf32>
    %41 = arith.negf %40 : vector<32x64xf32>
    %42 = math.exp %41 : vector<32x64xf32>
    %cst_27 = arith.constant 1.000000e+00 : f32
    %43 = vector.broadcast %cst_27 : f32 to vector<32x64xf32>
    %44 = arith.addf %43, %42 : vector<32x64xf32>
    %45 = arith.divf %43, %44 : vector<32x64xf32>
    %46 = vector.extract_strided_slice %45 {offsets = [0, 0], sizes = [32, 32], strides = [1, 1]} : vector<32x64xf32> to vector<32x32xf32>
    %47 = vector.extract_strided_slice %45 {offsets = [0, 32], sizes = [32, 32], strides = [1, 1]} : vector<32x64xf32> to vector<32x32xf32>
    %48 = arith.mulf %46, %9 : vector<32x32xf32>
    %49 = vector.extract_strided_slice %48 {offsets = [0, 0], sizes = [16, 32], strides = [1, 1]} : vector<32x32xf32> to vector<16x32xf32>
    %50 = vector.extract_strided_slice %48 {offsets = [16, 0], sizes = [16, 32], strides = [1, 1]} : vector<32x32xf32> to vector<16x32xf32>
    %51 = tpu.concatenate %49, %50 in 1 : vector<16x32xf32>, vector<16x32xf32> -> vector<16x64xf32>
    %52 = arith.truncf %51 : vector<16x64xf32> to vector<16x64xbf16>
    %cst_28 = arith.constant dense<0.000000e+00> : vector<16x64xf32>
    %53 = tpu.matmul %10, %52, %cst_28 {dimension_numbers = #tpu.dot_dimension_numbers<[1], [0], [0], [1], [0, 0, 1, 1], [], []>} : vector<16x16xbf16>, vector<16x64xbf16>, vector<16x64xf32> -> vector<16x64xf32>
    %54 = vector.extract_strided_slice %53 {offsets = [0, 0], sizes = [16, 32], strides = [1, 1]} : vector<16x64xf32> to vector<16x32xf32>
    %55 = vector.extract_strided_slice %53 {offsets = [0, 32], sizes = [16, 32], strides = [1, 1]} : vector<16x64xf32> to vector<16x32xf32>
    %56 = tpu.concatenate %54, %55 in 0 : vector<16x32xf32>, vector<16x32xf32> -> vector<32x32xf32>
    %57 = tpu.concatenate %48, %56 in 1 : vector<32x32xf32>, vector<32x32xf32> -> vector<32x64xf32>
    %58 = tpu.concatenate %57, %57, %57, %57, %57, %57, %57, %57 in 1 : vector<32x64xf32>, vector<32x64xf32>, vector<32x64xf32>, vector<32x64xf32>, vector<32x64xf32>, vector<32x64xf32>, vector<32x64xf32>, vector<32x64xf32> -> vector<32x512xf32>
    %59 = arith.mulf %58, %12 : vector<32x512xf32>
    %60 = arith.truncf %59 : vector<32x512xf32> to vector<32x512xbf16>
    %c0_29 = arith.constant 0 : index
    %c0_30 = arith.constant 0 : index
    %61 = vector.load %arg6[%c0_29, %c0_30] : memref<64x32xbf16, #tpu.memory_space<vmem>>, vector<64x32xbf16>
    %cst_31 = arith.constant dense<0.000000e+00> : vector<32x32xf32>
    %62 = tpu.matmul %31, %61, %cst_31 {dimension_numbers = #tpu.dot_dimension_numbers<[1], [0], [0], [1], [0, 0, 1, 1], [], []>} : vector<32x64xbf16>, vector<64x32xbf16>, vector<32x32xf32> -> vector<32x32xf32>
    %c0_32 = arith.constant 0 : index
    %c0_33 = arith.constant 0 : index
    %63 = vector.load %arg7[%c0_32, %c0_33] : memref<512x32xbf16, #tpu.memory_space<vmem>>, vector<512x32xbf16>
    %cst_34 = arith.constant dense<0.000000e+00> : vector<32x32xf32>
    %64 = tpu.matmul %60, %63, %cst_34 {dimension_numbers = #tpu.dot_dimension_numbers<[1], [0], [0], [1], [0, 0, 1, 1], [], []>} : vector<32x512xbf16>, vector<512x32xbf16>, vector<32x32xf32> -> vector<32x32xf32>
    %65 = arith.addf %62, %64 : vector<32x32xf32>
    %66 = arith.addf %65, %14 : vector<32x32xf32>
    %67 = math.tanh %66 : vector<32x32xf32>
    %68 = arith.mulf %47, %9 : vector<32x32xf32>
    %cst_35 = arith.constant 1.000000e+00 : f32
    %69 = vector.broadcast %cst_35 : f32 to vector<32x32xf32>
    %70 = arith.subf %69, %47 : vector<32x32xf32>
    %71 = arith.mulf %70, %67 : vector<32x32xf32>
    %72 = arith.addf %68, %71 : vector<32x32xf32>
    %73 = vector.extract_strided_slice %72 {offsets = [0, 0], sizes = [16, 32], strides = [1, 1]} : vector<32x32xf32> to vector<16x32xf32>
    %c0_36 = arith.constant 0 : index
    %c0_37 = arith.constant 0 : index
    %c0_38 = arith.constant 0 : index
    %74 = vector.load %arg12[%c0_36, %c0_37, %c0_38] : memref<2x16x32xf32, #tpu.memory_space<vmem>>, vector<1x16x32xf32>
    %75 = vector.shape_cast %74 : vector<1x16x32xf32> to vector<16x32xf32>
    %76 = vector.shape_cast %73 : vector<16x32xf32> to vector<1x16x32xf32>
    tpu.vector_store %arg12[%c0_36, %c0_37, %c0_38], %76 {strides = array<i32>} : memref<2x16x32xf32, #tpu.memory_space<vmem>>, vector<1x16x32xf32>,
    %77 = vector.extract_strided_slice %72 {offsets = [16, 0], sizes = [16, 32], strides = [1, 1]} : vector<32x32xf32> to vector<16x32xf32>
    %c1_39 = arith.constant 1 : index
    %c0_40 = arith.constant 0 : index
    %c0_41 = arith.constant 0 : index
    %78 = vector.load %arg12[%c1_39, %c0_40, %c0_41] : memref<2x16x32xf32, #tpu.memory_space<vmem>>, vector<1x16x32xf32>
    %79 = vector.shape_cast %78 : vector<1x16x32xf32> to vector<16x32xf32>
    %80 = vector.shape_cast %77 : vector<16x32xf32> to vector<1x16x32xf32>
    tpu.vector_store %arg12[%c1_39, %c0_40, %c0_41], %80 {strides = array<i32>} : memref<2x16x32xf32, #tpu.memory_space<vmem>>, vector<1x16x32xf32>,
    return
  }
  func.func @transform_0(%arg0: i32) -> (i32, i32, i32) {
    %c0_i32 = arith.constant 0 : i32
    %c0_i32_0 = arith.constant 0 : i32
    %c0_i32_1 = arith.constant 0 : i32
    return %arg0, %c0_i32, %c0_i32_0 : i32, i32, i32
  }
  func.func @transform_1(%arg0: i32) -> (i32, i32, i32) {
    %c0_i32 = arith.constant 0 : i32
    %c0_i32_0 = arith.constant 0 : i32
    %c0_i32_1 = arith.constant 0 : i32
    return %arg0, %c0_i32, %c0_i32_0 : i32, i32, i32
  }
  func.func @transform_2(%arg0: i32) -> (i32, i32) {
    %c0_i32 = arith.constant 0 : i32
    %c0_i32_0 = arith.constant 0 : i32
    %c0_i32_1 = arith.constant 0 : i32
    return %c0_i32, %c0_i32_0 : i32, i32
  }
  func.func @transform_3(%arg0: i32) -> (i32, i32) {
    %c0_i32 = arith.constant 0 : i32
    %c0_i32_0 = arith.constant 0 : i32
    %c0_i32_1 = arith.constant 0 : i32
    return %c0_i32, %c0_i32_0 : i32, i32
  }
  func.func @transform_4(%arg0: i32) -> (i32, i32) {
    %c0_i32 = arith.constant 0 : i32
    %c0_i32_0 = arith.constant 0 : i32
    %c0_i32_1 = arith.constant 0 : i32
    return %c0_i32, %c0_i32_0 : i32, i32
  }
  func.func @transform_5(%arg0: i32) -> (i32, i32) {
    %c0_i32 = arith.constant 0 : i32
    %c0_i32_0 = arith.constant 0 : i32
    %c0_i32_1 = arith.constant 0 : i32
    return %c0_i32, %c0_i32_0 : i32, i32
  }
  func.func @transform_6(%arg0: i32) -> (i32, i32) {
    %c0_i32 = arith.constant 0 : i32
    %c0_i32_0 = arith.constant 0 : i32
    %c0_i32_1 = arith.constant 0 : i32
    return %c0_i32, %c0_i32_0 : i32, i32
  }
  func.func @transform_7(%arg0: i32) -> (i32, i32) {
    %c0_i32 = arith.constant 0 : i32
    %c0_i32_0 = arith.constant 0 : i32
    %c0_i32_1 = arith.constant 0 : i32
    return %c0_i32, %c0_i32_0 : i32, i32
  }
  func.func @transform_8(%arg0: i32) -> (i32, i32) {
    %c0_i32 = arith.constant 0 : i32
    %c0_i32_0 = arith.constant 0 : i32
    %c0_i32_1 = arith.constant 0 : i32
    return %c0_i32, %c0_i32_0 : i32, i32
  }
  func.func @transform_9(%arg0: i32) -> (i32, i32) {
    %c0_i32 = arith.constant 0 : i32
    %c0_i32_0 = arith.constant 0 : i32
    %c0_i32_1 = arith.constant 0 : i32
    return %c0_i32, %c0_i32_0 : i32, i32
  }
  func.func @transform_10(%arg0: i32) -> (i32, i32) {
    %c0_i32 = arith.constant 0 : i32
    %c0_i32_0 = arith.constant 0 : i32
    %c0_i32_1 = arith.constant 0 : i32
    return %c0_i32, %c0_i32_0 : i32, i32
  }
  func.func @transform_11(%arg0: i32) -> (i32, i32, i32) {
    %c0_i32 = arith.constant 0 : i32
    %c0_i32_0 = arith.constant 0 : i32
    %c0_i32_1 = arith.constant 0 : i32
    return %arg0, %c0_i32, %c0_i32_0 : i32, i32, i32
  }
}

</mosaic_0001>

<llo_original>
// kernel: tpu_custom_call.1
$region0: #{tpu_custom_call.1}
  #allocation0 [shape = 'u32[]', space=smem, size = 0x4, offset = 0x4, fixed_abs, tag = 'smem constant byte address 0x4 - core index']
  #allocation1 [shape = 'u32[144,128]{1,0:T(1,128)}', space=vmem, size = 0x12000, scoped, tag = 'internal scratch']
  %s0 = inlined_call_operand.vmem [shape: f32[2,16,4], index: 0, kind: input, shape index: {}]
  %s1 = inlined_call_operand.vmem [shape: f32[2,16,32], index: 1, kind: input, shape index: {}]
  %s2 = inlined_call_operand.vmem [shape: bf16[16,16], index: 2, kind: input, shape index: {}]
  %s3 = inlined_call_operand.vmem [shape: bf16[64,64], index: 3, kind: input, shape index: {}]
  %s4 = inlined_call_operand.vmem [shape: bf16[512,64], index: 4, kind: input, shape index: {}]
  %s5 = inlined_call_operand.vmem [shape: bf16[64,32], index: 5, kind: input, shape index: {}]
  %s6 = inlined_call_operand.vmem [shape: bf16[512,32], index: 6, kind: input, shape index: {}]
  %s7 = inlined_call_operand.vmem [shape: f32[32,64], index: 7, kind: input, shape index: {}]
  %s8 = inlined_call_operand.vmem [shape: f32[32,512], index: 8, kind: input, shape index: {}]
  %s9 = inlined_call_operand.vmem [shape: f32[32,64], index: 9, kind: input, shape index: {}]
  %s10 = inlined_call_operand.vmem [shape: f32[32,32], index: 10, kind: input, shape index: {}]
  %s11 = inlined_call_operand.hbm [shape: f32[2,16,32], index: 11, kind: output, shape index: {}]
  %s12 = sld [smem:[#allocation0]]
  $region54: #{tpu_custom_call.1} parent=0
    _
  %s14 = ssub.s32 1, %s12
  %s15 = scalar_select 0, %s14, %s12
  $region1: #{tpu_custom_call.1} parent=0
    #allocation2 [shape = 'u8[16384]{0}', space=vmem, size = 0x4000, scoped, tag = 'output window, operand 0, single buffered']
    #allocation3 [shape = 's32[1]{0}', space=sflag, size = 0x4, scoped, tag = 'scoped memory for tpu_custom_call.1']
    %16 = vsyncpa [#allocation3], 0
    // Predicated region
    $region2: #{tpu_custom_call.1} parent=1 // pred_check
      _
    $region3: #{tpu_custom_call.1} parent=1 // pred_check_branch
      %18 = sbr.rel (0) target = $region5
    $region4: #{tpu_custom_call.1} parent=1 // pred_region
      _
    $region5: #{tpu_custom_call.1} parent=1 // pred_fallthru
      _
    // Predicated region
    $region6: #{tpu_custom_call.1} parent=1 // pred_check
      _
    $region7: #{tpu_custom_call.1} parent=1 // pred_check_branch
      %20 = sbr.rel (0) target = $region9
    $region8: #{tpu_custom_call.1} parent=1 // pred_region
      _
    $region9: #{tpu_custom_call.1} parent=1 // pred_fallthru
      _
    // Predicated region
    $region10: #{tpu_custom_call.1} parent=1 // pred_check
      _
    $region11: #{tpu_custom_call.1} parent=1 // pred_check_branch
      %22 = sbr.rel (0) target = $region13
    $region12: #{tpu_custom_call.1} parent=1 // pred_region
      _
    $region13: #{tpu_custom_call.1} parent=1 // pred_fallthru
      _
    // Predicated region
    $region14: #{tpu_custom_call.1} parent=1 // pred_check
      _
    $region15: #{tpu_custom_call.1} parent=1 // pred_check_branch
      %24 = sbr.rel (0) target = $region17
    $region16: #{tpu_custom_call.1} parent=1 // pred_region
      _
    $region17: #{tpu_custom_call.1} parent=1 // pred_fallthru
      _
    // Predicated region
    $region18: #{tpu_custom_call.1} parent=1 // pred_check
      _
    $region19: #{tpu_custom_call.1} parent=1 // pred_check_branch
      %26 = sbr.rel (0) target = $region21
    $region20: #{tpu_custom_call.1} parent=1 // pred_region
      _
    $region21: #{tpu_custom_call.1} parent=1 // pred_fallthru
      _
    // Predicated region
    $region22: #{tpu_custom_call.1} parent=1 // pred_check
      _
    $region23: #{tpu_custom_call.1} parent=1 // pred_check_branch
      %28 = sbr.rel (0) target = $region25
    $region24: #{tpu_custom_call.1} parent=1 // pred_region
      _
    $region25: #{tpu_custom_call.1} parent=1 // pred_fallthru
      _
    // Predicated region
    $region26: #{tpu_custom_call.1} parent=1 // pred_check
      _
    $region27: #{tpu_custom_call.1} parent=1 // pred_check_branch
      %30 = sbr.rel (0) target = $region29
    $region28: #{tpu_custom_call.1} parent=1 // pred_region
      _
    $region29: #{tpu_custom_call.1} parent=1 // pred_fallthru
      _
    // Predicated region
    $region30: #{tpu_custom_call.1} parent=1 // pred_check
      _
    $region31: #{tpu_custom_call.1} parent=1 // pred_check_branch
      %32 = sbr.rel (0) target = $region33
    $region32: #{tpu_custom_call.1} parent=1 // pred_region
      _
    $region33: #{tpu_custom_call.1} parent=1 // pred_fallthru
      _
    // Predicated region
    $region34: #{tpu_custom_call.1} parent=1 // pred_check
      _
    $region35: #{tpu_custom_call.1} parent=1 // pred_check_branch
      %34 = sbr.rel (0) target = $region37
    $region36: #{tpu_custom_call.1} parent=1 // pred_region
      _
    $region37: #{tpu_custom_call.1} parent=1 // pred_fallthru
      _
    // Predicated region
    $region38: #{tpu_custom_call.1} parent=1 // pred_check
      _
    $region39: #{tpu_custom_call.1} parent=1 // pred_check_branch
      %36 = sbr.rel (0) target = $region41
    $region40: #{tpu_custom_call.1} parent=1 // pred_region
      _
    $region41: #{tpu_custom_call.1} parent=1 // pred_fallthru
      _
    // Predicated region
    $region42: #{tpu_custom_call.1} parent=1 // pred_check
      _
    $region43: #{tpu_custom_call.1} parent=1 // pred_check_branch
      %38 = sbr.rel (0) target = $region45
    $region44: #{tpu_custom_call.1} parent=1 // pred_region
      _
    $region45: #{tpu_custom_call.1} parent=1 // pred_fallthru
      _
    %v40 = vld [vmem:[%s0] sm:$0xff]
    %v41 = vld [vmem:[%s0 + $0x8] sm:$0xff]
    %s42 = scalar_lea.vmem %s0, 16
    %v43 = vld [vmem:[%s42] sm:$0xff]
    %v44 = vld [vmem:[%s42 + $0x8] sm:$0xff]
    %v45 = vld [vmem:[%s1] sm:$0xff]
    %v46 = vld [vmem:[%s1 + $0x8] sm:$0xff]
    %s47 = scalar_lea.vmem %s1, 16
    %v48 = vld [vmem:[%s47] sm:$0xff]
    %v49 = vld [vmem:[%s47 + $0x8] sm:$0xff]
    %v50 = vld [vmem:[%s2] sm:$0xf]
    %v51 = vld [vmem:[%s2 + $0x4] sm:$0xf]
    %v52 = vld [vmem:[%s7] sm:$0xff]
    %v53 = vld [vmem:[%s7 + $0x8] sm:$0xff]
    %v54 = vld [vmem:[%s7 + $0x10] sm:$0xff]
    %v55 = vld [vmem:[%s7 + $0x18] sm:$0xff]
    %v56 = vld [vmem:[%s8] sm:$0xff]
    %v57 = vld [vmem:[%s8 + $0x8] sm:$0xff]
    %v58 = vld [vmem:[%s8 + $0x10] sm:$0xff]
    %v59 = vld [vmem:[%s8 + $0x18] sm:$0xff]
    %v60 = vld [vmem:[%s8 + $0x20] sm:$0xff]
    %v61 = vld [vmem:[%s8 + $0x28] sm:$0xff]
    %v62 = vld [vmem:[%s8 + $0x30] sm:$0xff]
    %v63 = vld [vmem:[%s8 + $0x38] sm:$0xff]
    %v64 = vld [vmem:[%s8 + $0x40] sm:$0xff]
    %v65 = vld [vmem:[%s8 + $0x48] sm:$0xff]
    %v66 = vld [vmem:[%s8 + $0x50] sm:$0xff]
    %v67 = vld [vmem:[%s8 + $0x58] sm:$0xff]
    %v68 = vld [vmem:[%s8 + $0x60] sm:$0xff]
    %v69 = vld [vmem:[%s8 + $0x68] sm:$0xff]
    %v70 = vld [vmem:[%s8 + $0x70] sm:$0xff]
    %v71 = vld [vmem:[%s8 + $0x78] sm:$0xff]
    %v72 = vld [vmem:[%s9] sm:$0xff]
    %v73 = vld [vmem:[%s9 + $0x8] sm:$0xff]
    %v74 = vld [vmem:[%s9 + $0x10] sm:$0xff]
    %v75 = vld [vmem:[%s9 + $0x18] sm:$0xff]
    %v76 = vld [vmem:[%s10] sm:$0xff]
    %v77 = vld [vmem:[%s10 + $0x8] sm:$0xff]
    %v78 = vld [vmem:[%s10 + $0x10] sm:$0xff]
    %v79 = vld [vmem:[%s10 + $0x18] sm:$0xff]
    %82 = vrot.lane.b32.xlu0 %v43, 4
    %v83 = vpop.permute.xlu0 %82
    %84 = vrot.lane.b32.xlu0 %v44, 4
    %v85 = vpop.permute.xlu0 %84
    %vm88 = vcmask 31744
    %v89 = vsel %vm88, %v40, %v83
    %v90 = vsel %vm88, %v41, %v85
    %v91 = vpack.c.bf16 %v90, %v89
    %v94 = vunpack.c.l.b16 %v50
    %v95 = vunpack.c.l.b16 %v51
    %v96 = vpack.c.b16 %v95, %v94
    %vm97 = vcmask 130048
    %v99 = vsel %vm97, %v96, 0
    %101 = vmatprep.subr.bf16.mxu0 0
    %102 = vmatpush1.bf16.msra.mxu0 0
    %103 = vmatprep.subr.bf16.mxu0 0
    %104 = vmatpush1.bf16.msra.mxu0 0
    %105 = vmatprep.subr.bf16.mxu0 0
    %106 = vmatpush1.bf16.msra.mxu0 0
    %107 = vmatprep.subr.bf16.mxu0 0
    %108 = vmatpush1.bf16.msra.mxu0 0
    %109 = vmatprep.subr.bf16.mxu0 0
    %110 = vmatpush1.bf16.msra.mxu0 0
    %111 = vmatprep.subr.bf16.mxu0 0
    %112 = vmatpush1.bf16.msra.mxu0 0
    %113 = vmatprep.subr.bf16.mxu0 0
    %114 = vmatpush1.bf16.msra.mxu0 0
    %115 = vmatprep.subr.bf16.mxu0 0
    %116 = vmatpush1.bf16.msra.mxu0 %v91
    %117 = vmatprep.subr.bf16.mxu0 0
    %118 = vmatpush2.bf16.msra.mxu0 0
    %119 = vmatprep.subr.bf16.mxu0 0
    %120 = vmatpush2.bf16.msra.mxu0 0
    %121 = vmatprep.subr.bf16.mxu0 0
    %122 = vmatpush2.bf16.msra.mxu0 0
    %123 = vmatprep.subr.bf16.mxu0 0
    %124 = vmatpush2.bf16.msra.mxu0 0
    %125 = vmatprep.subr.bf16.mxu0 0
    %126 = vmatpush2.bf16.msra.mxu0 0
    %127 = vmatprep.subr.bf16.mxu0 0
    %128 = vmatpush2.bf16.msra.mxu0 0
    %129 = vmatprep.subr.bf16.mxu0 0
    %130 = vmatpush2.bf16.msra.mxu0 0
    %131 = vmatprep.subr.bf16.mxu0 0
    %132 = vmatpush2.bf16.msra.mxu0 0
    %133 = vmatprep.mubr.bf16.mxu0 0
    %134 = vmatmul.mubr.bf16.gmra.mxu0 %v99
    %v135 = vpop.f32.mrf.mxu0
    %v136 = vadd.f32 0.0, %v135
    %v137 = vpop.f32.mrf.mxu0
    %v138 = vpop.f32.mrf.mxu0
    %v139 = vadd.f32 0.0, %v138
    %v140 = vpop.f32.mrf.mxu0
    %141 = vdwg.mxu0
    %144 = vrot.lane.b32.xlu0 %v136, 124
    %v145 = vpop.permute.xlu0 %144
    %146 = vrot.lane.b32.xlu0 %v139, 124
    %v147 = vpop.permute.xlu0 %146
    %148 = vrot.lane.b32.xlu0 %v136, 4
    %v149 = vpop.permute.xlu0 %148
    %150 = vrot.lane.b32.xlu0 %v139, 4
    %v151 = vpop.permute.xlu0 %150
    %152 = vrot.lane.b32.xlu0 %v145, 4
    %v153 = vpop.permute.xlu0 %152
    %154 = vrot.lane.b32.xlu0 %v147, 4
    %v155 = vpop.permute.xlu0 %154
    %v160 = vsel %vm88, %v40, %v149
    %v161 = vsel %vm88, %v41, %v151
    %v162 = vsel %vm88, %v43, %v153
    %v163 = vsel %vm88, %v44, %v155
    %166 = vrot.lane.b32.xlu0 %v48, 32
    %v167 = vpop.permute.xlu0 %166
    %168 = vrot.lane.b32.xlu0 %v49, 32
    %v169 = vpop.permute.xlu0 %168
    %vm172 = vcmask 261120
    %v173 = vsel %vm172, %v45, %v167
    %v174 = vsel %vm172, %v46, %v169
    %v175 = vpack.c.bf16 %v174, %v173
    %176 = vmatprep.subr.bf16.mxu0 0
    %177 = vmatpush1.bf16.msra.mxu0 0
    %178 = vmatprep.subr.bf16.mxu0 0
    %179 = vmatpush1.bf16.msra.mxu0 0
    %180 = vmatprep.subr.bf16.mxu0 0
    %181 = vmatpush1.bf16.msra.mxu0 0
    %182 = vmatprep.subr.bf16.mxu0 0
    %183 = vmatpush1.bf16.msra.mxu0 0
    %184 = vmatprep.subr.bf16.mxu0 0
    %185 = vmatpush1.bf16.msra.mxu0 0
    %186 = vmatprep.subr.bf16.mxu0 0
    %187 = vmatpush1.bf16.msra.mxu0 0
    %188 = vmatprep.subr.bf16.mxu0 0
    %189 = vmatpush1.bf16.msra.mxu0 0
    %190 = vmatprep.subr.bf16.mxu0 0
    %191 = vmatpush1.bf16.msra.mxu0 %v175
    %192 = vmatprep.subr.bf16.mxu0 0
    %193 = vmatpush2.bf16.msra.mxu0 0
    %194 = vmatprep.subr.bf16.mxu0 0
    %195 = vmatpush2.bf16.msra.mxu0 0
    %196 = vmatprep.subr.bf16.mxu0 0
    %197 = vmatpush2.bf16.msra.mxu0 0
    %198 = vmatprep.subr.bf16.mxu0 0
    %199 = vmatpush2.bf16.msra.mxu0 0
    %200 = vmatprep.subr.bf16.mxu0 0
    %201 = vmatpush2.bf16.msra.mxu0 0
    %202 = vmatprep.subr.bf16.mxu0 0
    %203 = vmatpush2.bf16.msra.mxu0 0
    %204 = vmatprep.subr.bf16.mxu0 0
    %205 = vmatpush2.bf16.msra.mxu0 0
    %206 = vmatprep.subr.bf16.mxu0 0
    %207 = vmatpush2.bf16.msra.mxu0 0
    %208 = vmatprep.mubr.bf16.mxu0 0
    %209 = vmatmul.mubr.bf16.gmra.mxu0 %v99
    %v210 = vpop.f32.mrf.mxu0
    %v211 = vadd.f32 0.0, %v210
    %v212 = vpop.f32.mrf.mxu0
    %v213 = vpop.f32.mrf.mxu0
    %v214 = vadd.f32 0.0, %v213
    %v215 = vpop.f32.mrf.mxu0
    %216 = vdwg.mxu0
    %219 = vrot.lane.b32.xlu0 %v211, 96
    %v220 = vpop.permute.xlu0 %219
    %221 = vrot.lane.b32.xlu0 %v214, 96
    %v222 = vpop.permute.xlu0 %221
    %223 = vrot.lane.b32.xlu0 %v211, 32
    %v224 = vpop.permute.xlu0 %223
    %225 = vrot.lane.b32.xlu0 %v214, 32
    %v226 = vpop.permute.xlu0 %225
    %227 = vrot.lane.b32.xlu0 %v220, 32
    %v228 = vpop.permute.xlu0 %227
    %229 = vrot.lane.b32.xlu0 %v222, 32
    %v230 = vpop.permute.xlu0 %229
    %v235 = vsel %vm172, %v45, %v224
    %v236 = vsel %vm172, %v46, %v226
    %v237 = vsel %vm172, %v48, %v228
    %v238 = vsel %vm172, %v49, %v230
    %243 = vrot.lane.b32.xlu0 %v160, 8
    %v244 = vpop.permute.xlu0 %243
    %245 = vrot.lane.b32.xlu0 %v161, 8
    %v246 = vpop.permute.xlu0 %245
    %247 = vrot.lane.b32.xlu0 %v162, 8
    %v248 = vpop.permute.xlu0 %247
    %249 = vrot.lane.b32.xlu0 %v163, 8
    %v250 = vpop.permute.xlu0 %249
    %255 = vrot.lane.b32.xlu0 %v160, 16
    %v256 = vpop.permute.xlu0 %255
    %257 = vrot.lane.b32.xlu0 %v161, 16
    %v258 = vpop.permute.xlu0 %257
    %259 = vrot.lane.b32.xlu0 %v162, 16
    %v260 = vpop.permute.xlu0 %259
    %261 = vrot.lane.b32.xlu0 %v163, 16
    %v262 = vpop.permute.xlu0 %261
    %267 = vrot.lane.b32.xlu0 %v160, 24
    %v268 = vpop.permute.xlu0 %267
    %269 = vrot.lane.b32.xlu0 %v161, 24
    %v270 = vpop.permute.xlu0 %269
    %271 = vrot.lane.b32.xlu0 %v162, 24
    %v272 = vpop.permute.xlu0 %271
    %273 = vrot.lane.b32.xlu0 %v163, 24
    %v274 = vpop.permute.xlu0 %273
    %279 = vrot.lane.b32.xlu0 %v160, 32
    %v280 = vpop.permute.xlu0 %279
    %281 = vrot.lane.b32.xlu0 %v161, 32
    %v282 = vpop.permute.xlu0 %281
    %283 = vrot.lane.b32.xlu0 %v162, 32
    %v284 = vpop.permute.xlu0 %283
    %285 = vrot.lane.b32.xlu0 %v163, 32
    %v286 = vpop.permute.xlu0 %285
    %291 = vrot.lane.b32.xlu0 %v160, 40
    %v292 = vpop.permute.xlu0 %291
    %293 = vrot.lane.b32.xlu0 %v161, 40
    %v294 = vpop.permute.xlu0 %293
    %295 = vrot.lane.b32.xlu0 %v162, 40
    %v296 = vpop.permute.xlu0 %295
    %297 = vrot.lane.b32.xlu0 %v163, 40
    %v298 = vpop.permute.xlu0 %297
    %303 = vrot.lane.b32.xlu0 %v160, 48
    %v304 = vpop.permute.xlu0 %303
    %305 = vrot.lane.b32.xlu0 %v161, 48
    %v306 = vpop.permute.xlu0 %305
    %307 = vrot.lane.b32.xlu0 %v162, 48
    %v308 = vpop.permute.xlu0 %307
    %309 = vrot.lane.b32.xlu0 %v163, 48
    %v310 = vpop.permute.xlu0 %309
    %315 = vrot.lane.b32.xlu0 %v160, 56
    %v316 = vpop.permute.xlu0 %315
    %317 = vrot.lane.b32.xlu0 %v161, 56
    %v318 = vpop.permute.xlu0 %317
    %319 = vrot.lane.b32.xlu0 %v162, 56
    %v320 = vpop.permute.xlu0 %319
    %321 = vrot.lane.b32.xlu0 %v163, 56
    %v322 = vpop.permute.xlu0 %321
    %vm327 = vcmask 64512
    %v328 = vsel %vm327, %v160, %v244
    %v329 = vsel %vm327, %v161, %v246
    %v330 = vsel %vm327, %v162, %v248
    %v331 = vsel %vm327, %v163, %v250
    %v332 = vsel %vm97, %v328, %v256
    %v333 = vsel %vm97, %v329, %v258
    %v334 = vsel %vm97, %v330, %v260
    %v335 = vsel %vm97, %v331, %v262
    %vm336 = vcmask 195584
    %v337 = vsel %vm336, %v332, %v268
    %v338 = vsel %vm336, %v333, %v270
    %v339 = vsel %vm336, %v334, %v272
    %v340 = vsel %vm336, %v335, %v274
    %v341 = vsel %vm172, %v337, %v280
    %v342 = vsel %vm172, %v338, %v282
    %v343 = vsel %vm172, %v339, %v284
    %v344 = vsel %vm172, %v340, %v286
    %vm345 = vcmask 326656
    %v346 = vsel %vm345, %v341, %v292
    %v347 = vsel %vm345, %v342, %v294
    %v348 = vsel %vm345, %v343, %v296
    %v349 = vsel %vm345, %v344, %v298
    %vm350 = vcmask 392192
    %v351 = vsel %vm350, %v346, %v304
    %v352 = vsel %vm350, %v347, %v306
    %v353 = vsel %vm350, %v348, %v308
    %v354 = vsel %vm350, %v349, %v310
    %vm355 = vcmask 457728
    %v356 = vsel %vm355, %v351, %v316
    %v357 = vsel %vm355, %v352, %v318
    %v358 = vsel %vm355, %v353, %v320
    %v359 = vsel %vm355, %v354, %v322
    %v360 = vmul.f32 %v356, %v52
    %v361 = vmul.f32 %v357, %v53
    %v362 = vmul.f32 %v358, %v54
    %v363 = vmul.f32 %v359, %v55
    %v364 = vpack.c.bf16 %v361, %v360
    %v365 = vpack.c.bf16 %v363, %v362
    %370 = vrot.lane.b32.xlu0 %v235, 64
    %v371 = vpop.permute.xlu0 %370
    %372 = vrot.lane.b32.xlu0 %v236, 64
    %v373 = vpop.permute.xlu0 %372
    %374 = vrot.lane.b32.xlu0 %v237, 64
    %v375 = vpop.permute.xlu0 %374
    %376 = vrot.lane.b32.xlu0 %v238, 64
    %v377 = vpop.permute.xlu0 %376
    %vm382 = vcmask 523264
    %v383 = vsel %vm382, %v235, %v371
    %v384 = vsel %vm382, %v236, %v373
    %v385 = vsel %vm382, %v237, %v375
    %v386 = vsel %vm382, %v238, %v377
    %v387 = vmul.f32 %v383, %v56
    %v388 = vmul.f32 %v383, %v57
    %v389 = vmul.f32 %v383, %v58
    %v390 = vmul.f32 %v383, %v59
    %v391 = vmul.f32 %v384, %v60
    %v392 = vmul.f32 %v384, %v61
    %v393 = vmul.f32 %v384, %v62
    %v394 = vmul.f32 %v384, %v63
    %v395 = vmul.f32 %v385, %v64
    %v396 = vmul.f32 %v385, %v65
    %v397 = vmul.f32 %v385, %v66
    %v398 = vmul.f32 %v385, %v67
    %v399 = vmul.f32 %v386, %v68
    %v400 = vmul.f32 %v386, %v69
    %v401 = vmul.f32 %v386, %v70
    %v402 = vmul.f32 %v386, %v71
    %v403 = vpack.c.bf16 %v391, %v387
    %v404 = vpack.c.bf16 %v392, %v388
    %v405 = vpack.c.bf16 %v393, %v389
    %v406 = vpack.c.bf16 %v394, %v390
    %v407 = vpack.c.bf16 %v399, %v395
    %v408 = vpack.c.bf16 %v400, %v396
    %v409 = vpack.c.bf16 %v401, %v397
    %v410 = vpack.c.bf16 %v402, %v398
    %v411 = vld [vmem:[%s3] sm:$0xf]
    %v412 = vld [vmem:[%s3 + $0x4] sm:$0xf]
    %v413 = vld [vmem:[%s3 + $0x8] sm:$0xf]
    %v414 = vld [vmem:[%s3 + $0xc] sm:$0xf]
    %v415 = vld [vmem:[%s3 + $0x10] sm:$0xf]
    %v416 = vld [vmem:[%s3 + $0x14] sm:$0xf]
    %v417 = vld [vmem:[%s3 + $0x18] sm:$0xf]
    %v418 = vld [vmem:[%s3 + $0x1c] sm:$0xf]
    %v419 = vld [vmem:[%s4] sm:$0xf]
    %v420 = vld [vmem:[%s4 + $0x4] sm:$0xf]
    %v421 = vld [vmem:[%s4 + $0x8] sm:$0xf]
    %v422 = vld [vmem:[%s4 + $0xc] sm:$0xf]
    %v423 = vld [vmem:[%s4 + $0x10] sm:$0xf]
    %v424 = vld [vmem:[%s4 + $0x14] sm:$0xf]
    %v425 = vld [vmem:[%s4 + $0x18] sm:$0xf]
    %v426 = vld [vmem:[%s4 + $0x1c] sm:$0xf]
    %v427 = vld [vmem:[%s4 + $0x20] sm:$0xf]
    %v428 = vld [vmem:[%s4 + $0x24] sm:$0xf]
    %v429 = vld [vmem:[%s4 + $0x28] sm:$0xf]
    %v430 = vld [vmem:[%s4 + $0x2c] sm:$0xf]
    %v431 = vld [vmem:[%s4 + $0x30] sm:$0xf]
    %v432 = vld [vmem:[%s4 + $0x34] sm:$0xf]
    %v433 = vld [vmem:[%s4 + $0x38] sm:$0xf]
    %v434 = vld [vmem:[%s4 + $0x3c] sm:$0xf]
    %v435 = vld [vmem:[%s4 + $0x40] sm:$0xf]
    %v436 = vld [vmem:[%s4 + $0x44] sm:$0xf]
    %v437 = vld [vmem:[%s4 + $0x48] sm:$0xf]
    %v438 = vld [vmem:[%s4 + $0x4c] sm:$0xf]
    %v439 = vld [vmem:[%s4 + $0x50] sm:$0xf]
    %v440 = vld [vmem:[%s4 + $0x54] sm:$0xf]
    %v441 = vld [vmem:[%s4 + $0x58] sm:$0xf]
    %v442 = vld [vmem:[%s4 + $0x5c] sm:$0xf]
    %v443 = vld [vmem:[%s4 + $0x60] sm:$0xf]
    %v444 = vld [vmem:[%s4 + $0x64] sm:$0xf]
    %v445 = vld [vmem:[%s4 + $0x68] sm:$0xf]
    %v446 = vld [vmem:[%s4 + $0x6c] sm:$0xf]
    %v447 = vld [vmem:[%s4 + $0x70] sm:$0xf]
    %v448 = vld [vmem:[%s4 + $0x74] sm:$0xf]
    %v449 = vld [vmem:[%s4 + $0x78] sm:$0xf]
    %v450 = vld [vmem:[%s4 + $0x7c] sm:$0xf]
    %v451 = vld [vmem:[%s4 + $0x80] sm:$0xf]
    %v452 = vld [vmem:[%s4 + $0x84] sm:$0xf]
    %v453 = vld [vmem:[%s4 + $0x88] sm:$0xf]
    %v454 = vld [vmem:[%s4 + $0x8c] sm:$0xf]
    %v455 = vld [vmem:[%s4 + $0x90] sm:$0xf]
    %v456 = vld [vmem:[%s4 + $0x94] sm:$0xf]
    %v457 = vld [vmem:[%s4 + $0x98] sm:$0xf]
    %v458 = vld [vmem:[%s4 + $0x9c] sm:$0xf]
    %v459 = vld [vmem:[%s4 + $0xa0] sm:$0xf]
    %v460 = vld [vmem:[%s4 + $0xa4] sm:$0xf]
    %v461 = vld [vmem:[%s4 + $0xa8] sm:$0xf]
    %v462 = vld [vmem:[%s4 + $0xac] sm:$0xf]
    %v463 = vld [vmem:[%s4 + $0xb0] sm:$0xf]
    %v464 = vld [vmem:[%s4 + $0xb4] sm:$0xf]
    %v465 = vld [vmem:[%s4 + $0xb8] sm:$0xf]
    %v466 = vld [vmem:[%s4 + $0xbc] sm:$0xf]
    %v467 = vld [vmem:[%s4 + $0xc0] sm:$0xf]
    %v468 = vld [vmem:[%s4 + $0xc4] sm:$0xf]
    %v469 = vld [vmem:[%s4 + $0xc8] sm:$0xf]
    %v470 = vld [vmem:[%s4 + $0xcc] sm:$0xf]
    %v471 = vld [vmem:[%s4 + $0xd0] sm:$0xf]
    %v472 = vld [vmem:[%s4 + $0xd4] sm:$0xf]
    %v473 = vld [vmem:[%s4 + $0xd8] sm:$0xf]
    %v474 = vld [vmem:[%s4 + $0xdc] sm:$0xf]
    %v475 = vld [vmem:[%s4 + $0xe0] sm:$0xf]
    %v476 = vld [vmem:[%s4 + $0xe4] sm:$0xf]
    %v477 = vld [vmem:[%s4 + $0xe8] sm:$0xf]
    %v478 = vld [vmem:[%s4 + $0xec] sm:$0xf]
    %v479 = vld [vmem:[%s4 + $0xf0] sm:$0xf]
    %v480 = vld [vmem:[%s4 + $0xf4] sm:$0xf]
    %v481 = vld [vmem:[%s4 + $0xf8] sm:$0xf]
    %v482 = vld [vmem:[%s4 + $0xfc] sm:$0xf]
    %v547 = vunpack.c.l.b16 %v419
    %v548 = vunpack.c.l.b16 %v420
    %v549 = vunpack.c.l.b16 %v421
    %v550 = vunpack.c.l.b16 %v422
    %v551 = vunpack.c.l.b16 %v423
    %v552 = vunpack.c.l.b16 %v424
    %v553 = vunpack.c.l.b16 %v425
    %v554 = vunpack.c.l.b16 %v426
    %v555 = vunpack.c.l.b16 %v427
    %v556 = vunpack.c.l.b16 %v428
    %v557 = vunpack.c.l.b16 %v429
    %v558 = vunpack.c.l.b16 %v430
    %v559 = vunpack.c.l.b16 %v431
    %v560 = vunpack.c.l.b16 %v432
    %v561 = vunpack.c.l.b16 %v433
    %v562 = vunpack.c.l.b16 %v434
    %v563 = vunpack.c.l.b16 %v435
    %v564 = vunpack.c.l.b16 %v436
    %v565 = vunpack.c.l.b16 %v437
    %v566 = vunpack.c.l.b16 %v438
    %v567 = vunpack.c.l.b16 %v439
    %v568 = vunpack.c.l.b16 %v440
    %v569 = vunpack.c.l.b16 %v441
    %v570 = vunpack.c.l.b16 %v442
    %v571 = vunpack.c.l.b16 %v443
    %v572 = vunpack.c.l.b16 %v444
    %v573 = vunpack.c.l.b16 %v445
    %v574 = vunpack.c.l.b16 %v446
    %v575 = vunpack.c.l.b16 %v447
    %v576 = vunpack.c.l.b16 %v448
    %v577 = vunpack.c.l.b16 %v449
    %v578 = vunpack.c.l.b16 %v450
    %v579 = vunpack.c.l.b16 %v451
    %v580 = vunpack.c.l.b16 %v452
    %v581 = vunpack.c.l.b16 %v453
    %v582 = vunpack.c.l.b16 %v454
    %v583 = vunpack.c.l.b16 %v455
    %v584 = vunpack.c.l.b16 %v456
    %v585 = vunpack.c.l.b16 %v457
    %v586 = vunpack.c.l.b16 %v458
    %v587 = vunpack.c.l.b16 %v459
    %v588 = vunpack.c.l.b16 %v460
    %v589 = vunpack.c.l.b16 %v461
    %v590 = vunpack.c.l.b16 %v462
    %v591 = vunpack.c.l.b16 %v463
    %v592 = vunpack.c.l.b16 %v464
    %v593 = vunpack.c.l.b16 %v465
    %v594 = vunpack.c.l.b16 %v466
    %v595 = vunpack.c.l.b16 %v467
    %v596 = vunpack.c.l.b16 %v468
    %v597 = vunpack.c.l.b16 %v469
    %v598 = vunpack.c.l.b16 %v470
    %v599 = vunpack.c.l.b16 %v471
    %v600 = vunpack.c.l.b16 %v472
    %v601 = vunpack.c.l.b16 %v473
    %v602 = vunpack.c.l.b16 %v474
    %v603 = vunpack.c.l.b16 %v475
    %v604 = vunpack.c.l.b16 %v476
    %v605 = vunpack.c.l.b16 %v477
    %v606 = vunpack.c.l.b16 %v478
    %v607 = vunpack.c.l.b16 %v479
    %v608 = vunpack.c.l.b16 %v480
    %v609 = vunpack.c.l.b16 %v481
    %v610 = vunpack.c.l.b16 %v482
    %v611 = vpack.c.b16 %v548, %v547
    %v612 = vpack.c.b16 %v550, %v549
    %v613 = vpack.c.b16 %v552, %v551
    %v614 = vpack.c.b16 %v554, %v553
    %v615 = vpack.c.b16 %v556, %v555
    %v616 = vpack.c.b16 %v558, %v557
    %v617 = vpack.c.b16 %v560, %v559
    %v618 = vpack.c.b16 %v562, %v561
    %v619 = vpack.c.b16 %v564, %v563
    %v620 = vpack.c.b16 %v566, %v565
    %v621 = vpack.c.b16 %v568, %v567
    %v622 = vpack.c.b16 %v570, %v569
    %v623 = vpack.c.b16 %v572, %v571
    %v624 = vpack.c.b16 %v574, %v573
    %v625 = vpack.c.b16 %v576, %v575
    %v626 = vpack.c.b16 %v578, %v577
    %v627 = vpack.c.b16 %v580, %v579
    %v628 = vpack.c.b16 %v582, %v581
    %v629 = vpack.c.b16 %v584, %v583
    %v630 = vpack.c.b16 %v586, %v585
    %v631 = vpack.c.b16 %v588, %v587
    %v632 = vpack.c.b16 %v590, %v589
    %v633 = vpack.c.b16 %v592, %v591
    %v634 = vpack.c.b16 %v594, %v593
    %v635 = vpack.c.b16 %v596, %v595
    %v636 = vpack.c.b16 %v598, %v597
    %v637 = vpack.c.b16 %v600, %v599
    %v638 = vpack.c.b16 %v602, %v601
    %v639 = vpack.c.b16 %v604, %v603
    %v640 = vpack.c.b16 %v606, %v605
    %v641 = vpack.c.b16 %v608, %v607
    %v642 = vpack.c.b16 %v610, %v609
    %675 = vmatprep.subr.bf16.mxu0 0
    %676 = vmatpush1.bf16.msra.mxu0 %v618
    %677 = vmatprep.subr.bf16.mxu0 0
    %678 = vmatpush1.bf16.msra.mxu0 %v617
    %679 = vmatprep.subr.bf16.mxu0 0
    %680 = vmatpush1.bf16.msra.mxu0 %v616
    %681 = vmatprep.subr.bf16.mxu0 0
    %682 = vmatpush1.bf16.msra.mxu0 %v615
    %683 = vmatprep.subr.bf16.mxu0 0
    %684 = vmatpush1.bf16.msra.mxu0 %v614
    %685 = vmatprep.subr.bf16.mxu0 0
    %686 = vmatpush1.bf16.msra.mxu0 %v613
    %687 = vmatprep.subr.bf16.mxu0 0
    %688 = vmatpush1.bf16.msra.mxu0 %v612
    %689 = vmatprep.subr.bf16.mxu0 0
    %690 = vmatpush1.bf16.msra.mxu0 %v611
    %691 = vmatprep.subr.bf16.mxu0 0
    %692 = vmatpush2.bf16.msra.mxu0 %v626
    %693 = vmatprep.subr.bf16.mxu0 0
    %694 = vmatpush2.bf16.msra.mxu0 %v625
    %695 = vmatprep.subr.bf16.mxu0 0
    %696 = vmatpush2.bf16.msra.mxu0 %v624
    %697 = vmatprep.subr.bf16.mxu0 0
    %698 = vmatpush2.bf16.msra.mxu0 %v623
    %699 = vmatprep.subr.bf16.mxu0 0
    %700 = vmatpush2.bf16.msra.mxu0 %v622
    %701 = vmatprep.subr.bf16.mxu0 0
    %702 = vmatpush2.bf16.msra.mxu0 %v621
    %703 = vmatprep.subr.bf16.mxu0 0
    %704 = vmatpush2.bf16.msra.mxu0 %v620
    %705 = vmatprep.subr.bf16.mxu0 0
    %706 = vmatpush2.bf16.msra.mxu0 %v619
    %707 = vmatprep.mubr.bf16.mxu0 %v404
    %708 = vmatmul.mubr.bf16.gmra.mxu0 %v403
    %v709 = vpop.f32.mrf.mxu0
    %v710 = vadd.f32 0.0, %v709
    %v711 = vpop.f32.mrf.mxu0
    %v712 = vpop.f32.mrf.mxu0
    %v713 = vadd.f32 0.0, %v712
    %v714 = vpop.f32.mrf.mxu0
    %715 = vmatprep.mubr.bf16.mxu0 %v408
    %716 = vmatmul.mubr.bf16.gmra.mxu0 %v407
    %v717 = vpop.f32.mrf.mxu0
    %v718 = vadd.f32 0.0, %v717
    %v719 = vpop.f32.mrf.mxu0
    %v720 = vpop.f32.mrf.mxu0
    %v721 = vadd.f32 0.0, %v720
    %v722 = vpop.f32.mrf.mxu0
    %723 = vdwg.mxu0
    %724 = vmatprep.subr.bf16.mxu0 0
    %725 = vmatpush1.bf16.msra.mxu0 %v634
    %726 = vmatprep.subr.bf16.mxu0 0
    %727 = vmatpush1.bf16.msra.mxu0 %v633
    %728 = vmatprep.subr.bf16.mxu0 0
    %729 = vmatpush1.bf16.msra.mxu0 %v632
    %730 = vmatprep.subr.bf16.mxu0 0
    %731 = vmatpush1.bf16.msra.mxu0 %v631
    %732 = vmatprep.subr.bf16.mxu0 0
    %733 = vmatpush1.bf16.msra.mxu0 %v630
    %734 = vmatprep.subr.bf16.mxu0 0
    %735 = vmatpush1.bf16.msra.mxu0 %v629
    %736 = vmatprep.subr.bf16.mxu0 0
    %737 = vmatpush1.bf16.msra.mxu0 %v628
    %738 = vmatprep.subr.bf16.mxu0 0
    %739 = vmatpush1.bf16.msra.mxu0 %v627
    %740 = vmatprep.subr.bf16.mxu0 0
    %741 = vmatpush2.bf16.msra.mxu0 %v642
    %742 = vmatprep.subr.bf16.mxu0 0
    %743 = vmatpush2.bf16.msra.mxu0 %v641
    %744 = vmatprep.subr.bf16.mxu0 0
    %745 = vmatpush2.bf16.msra.mxu0 %v640
    %746 = vmatprep.subr.bf16.mxu0 0
    %747 = vmatpush2.bf16.msra.mxu0 %v639
    %748 = vmatprep.subr.bf16.mxu0 0
    %749 = vmatpush2.bf16.msra.mxu0 %v638
    %750 = vmatprep.subr.bf16.mxu0 0
    %751 = vmatpush2.bf16.msra.mxu0 %v637
    %752 = vmatprep.subr.bf16.mxu0 0
    %753 = vmatpush2.bf16.msra.mxu0 %v636
    %754 = vmatprep.subr.bf16.mxu0 0
    %755 = vmatpush2.bf16.msra.mxu0 %v635
    %756 = vmatprep.mubr.bf16.mxu0 %v406
    %757 = vmatmul.mubr.bf16.gmra.mxu0 %v405
    %v758 = vpop.f32.mrf.mxu0
    %v759 = vadd.f32 %v710, %v758
    %v760 = vpop.f32.mrf.mxu0
    %v761 = vpop.f32.mrf.mxu0
    %v762 = vadd.f32 %v713, %v761
    %v763 = vpop.f32.mrf.mxu0
    %764 = vmatprep.mubr.bf16.mxu0 %v410
    %765 = vmatmul.mubr.bf16.gmra.mxu0 %v409
    %v766 = vpop.f32.mrf.mxu0
    %v767 = vadd.f32 %v718, %v766
    %v768 = vpop.f32.mrf.mxu0
    %v769 = vpop.f32.mrf.mxu0
    %v770 = vadd.f32 %v721, %v769
    %v771 = vpop.f32.mrf.mxu0
    %772 = vdwg.mxu0
    %v781 = vunpack.c.l.b16 %v411
    %v782 = vunpack.c.l.b16 %v412
    %v783 = vunpack.c.l.b16 %v413
    %v784 = vunpack.c.l.b16 %v414
    %v785 = vunpack.c.l.b16 %v415
    %v786 = vunpack.c.l.b16 %v416
    %v787 = vunpack.c.l.b16 %v417
    %v788 = vunpack.c.l.b16 %v418
    %v789 = vpack.c.b16 %v782, %v781
    %v790 = vpack.c.b16 %v784, %v783
    %v791 = vpack.c.b16 %v786, %v785
    %v792 = vpack.c.b16 %v788, %v787
    %v798 = vsel %vm382, %v364, 0
    %v801 = vsel %vm382, %v365, 0
    %803 = vmatprep.subr.bf16.mxu0 0
    %804 = vmatpush1.bf16.msra.mxu0 0
    %805 = vmatprep.subr.bf16.mxu0 0
    %806 = vmatpush1.bf16.msra.mxu0 0
    %807 = vmatprep.subr.bf16.mxu0 0
    %808 = vmatpush1.bf16.msra.mxu0 0
    %809 = vmatprep.subr.bf16.mxu0 0
    %810 = vmatpush1.bf16.msra.mxu0 0
    %811 = vmatprep.subr.bf16.mxu0 0
    %812 = vmatpush1.bf16.msra.mxu0 %v792
    %813 = vmatprep.subr.bf16.mxu0 0
    %814 = vmatpush1.bf16.msra.mxu0 %v791
    %815 = vmatprep.subr.bf16.mxu0 0
    %816 = vmatpush1.bf16.msra.mxu0 %v790
    %817 = vmatprep.subr.bf16.mxu0 0
    %818 = vmatpush1.bf16.msra.mxu0 %v789
    %819 = vmatprep.subr.bf16.mxu0 0
    %820 = vmatpush2.bf16.msra.mxu0 0
    %821 = vmatprep.subr.bf16.mxu0 0
    %822 = vmatpush2.bf16.msra.mxu0 0
    %823 = vmatprep.subr.bf16.mxu0 0
    %824 = vmatpush2.bf16.msra.mxu0 0
    %825 = vmatprep.subr.bf16.mxu0 0
    %826 = vmatpush2.bf16.msra.mxu0 0
    %827 = vmatprep.subr.bf16.mxu0 0
    %828 = vmatpush2.bf16.msra.mxu0 0
    %829 = vmatprep.subr.bf16.mxu0 0
    %830 = vmatpush2.bf16.msra.mxu0 0
    %831 = vmatprep.subr.bf16.mxu0 0
    %832 = vmatpush2.bf16.msra.mxu0 0
    %833 = vmatprep.subr.bf16.mxu0 0
    %834 = vmatpush2.bf16.msra.mxu0 0
    %835 = vmatprep.mubr.bf16.mxu0 0
    %836 = vmatmul.mubr.bf16.gmra.mxu0 %v798
    %v837 = vpop.f32.mrf.mxu0
    %v838 = vadd.f32 %v759, %v837
    %v839 = vpop.f32.mrf.mxu0
    %v840 = vpop.f32.mrf.mxu0
    %v841 = vadd.f32 %v762, %v840
    %v842 = vpop.f32.mrf.mxu0
    %843 = vmatprep.mubr.bf16.mxu0 0
    %844 = vmatmul.mubr.bf16.gmra.mxu0 %v801
    %v845 = vpop.f32.mrf.mxu0
    %v846 = vadd.f32 %v767, %v845
    %v847 = vpop.f32.mrf.mxu0
    %v848 = vpop.f32.mrf.mxu0
    %v849 = vadd.f32 %v770, %v848
    %v850 = vpop.f32.mrf.mxu0
    %851 = vdwg.mxu0
    %v852 = vadd.f32 %v838, %v72
    %v853 = vadd.f32 %v841, %v73
    %v854 = vadd.f32 %v846, %v74
    %v855 = vadd.f32 %v849, %v75
    %v856 = vxor.u32 %v852, 2147483648
    %v857 = vxor.u32 %v853, 2147483648
    %v858 = vxor.u32 %v854, 2147483648
    %v859 = vxor.u32 %v855, 2147483648
    %v860 = vmul.f32 %v856, 1.442695
    %v861 = vpow.pop %v860
    %v862 = vmul.f32 %v857, 1.442695
    %v863 = vpow.pop %v862
    %v864 = vmul.f32 %v858, 1.442695
    %v865 = vpow.pop %v864
    %v866 = vmul.f32 %v859, 1.442695
    %v867 = vpow.pop %v866
    %v868 = vadd.f32 %v861, 1.0
    %v869 = vadd.f32 %v863, 1.0
    %v870 = vadd.f32 %v865, 1.0
    %v871 = vadd.f32 %v867, 1.0
    %v872 = vrcp.pop %v868
    %v873 = vmul.f32 1.0, %v872
    %v874 = vrcp.pop %v869
    %v875 = vmul.f32 1.0, %v874
    %v876 = vrcp.pop %v870
    %v877 = vmul.f32 1.0, %v876
    %v878 = vrcp.pop %v871
    %v879 = vmul.f32 1.0, %v878
    %v880 = vmul.f32 %v873, %v45
    %v881 = vmul.f32 %v875, %v46
    %v882 = vmul.f32 %v877, %v48
    %v883 = vmul.f32 %v879, %v49
    %886 = vrot.lane.b32.xlu0 %v882, 32
    %v887 = vpop.permute.xlu0 %886
    %888 = vrot.lane.b32.xlu0 %v883, 32
    %v889 = vpop.permute.xlu0 %888
    %v892 = vsel %vm172, %v880, %v887
    %v893 = vsel %vm172, %v881, %v889
    %v894 = vpack.c.bf16 %v893, %v892
    %895 = vmatprep.subr.bf16.mxu0 0
    %896 = vmatpush1.bf16.msra.mxu0 0
    %897 = vmatprep.subr.bf16.mxu0 0
    %898 = vmatpush1.bf16.msra.mxu0 0
    %899 = vmatprep.subr.bf16.mxu0 0
    %900 = vmatpush1.bf16.msra.mxu0 0
    %901 = vmatprep.subr.bf16.mxu0 0
    %902 = vmatpush1.bf16.msra.mxu0 0
    %903 = vmatprep.subr.bf16.mxu0 0
    %904 = vmatpush1.bf16.msra.mxu0 0
    %905 = vmatprep.subr.bf16.mxu0 0
    %906 = vmatpush1.bf16.msra.mxu0 0
    %907 = vmatprep.subr.bf16.mxu0 0
    %908 = vmatpush1.bf16.msra.mxu0 0
    %909 = vmatprep.subr.bf16.mxu0 0
    %910 = vmatpush1.bf16.msra.mxu0 %v894
    %911 = vmatprep.subr.bf16.mxu0 0
    %912 = vmatpush2.bf16.msra.mxu0 0
    %913 = vmatprep.subr.bf16.mxu0 0
    %914 = vmatpush2.bf16.msra.mxu0 0
    %915 = vmatprep.subr.bf16.mxu0 0
    %916 = vmatpush2.bf16.msra.mxu0 0
    %917 = vmatprep.subr.bf16.mxu0 0
    %918 = vmatpush2.bf16.msra.mxu0 0
    %919 = vmatprep.subr.bf16.mxu0 0
    %920 = vmatpush2.bf16.msra.mxu0 0
    %921 = vmatprep.subr.bf16.mxu0 0
    %922 = vmatpush2.bf16.msra.mxu0 0
    %923 = vmatprep.subr.bf16.mxu0 0
    %924 = vmatpush2.bf16.msra.mxu0 0
    %925 = vmatprep.subr.bf16.mxu0 0
    %926 = vmatpush2.bf16.msra.mxu0 0
    %927 = vmatprep.mubr.bf16.mxu0 0
    %928 = vmatmul.mubr.bf16.gmra.mxu0 %v99
    %v929 = vpop.f32.mrf.mxu0
    %v930 = vadd.f32 0.0, %v929
    %v931 = vpop.f32.mrf.mxu0
    %v932 = vpop.f32.mrf.mxu0
    %v933 = vadd.f32 0.0, %v932
    %v934 = vpop.f32.mrf.mxu0
    %935 = vdwg.mxu0
    %938 = vrot.lane.b32.xlu0 %v930, 96
    %v939 = vpop.permute.xlu0 %938
    %940 = vrot.lane.b32.xlu0 %v933, 96
    %v941 = vpop.permute.xlu0 %940
    %942 = vrot.lane.b32.xlu0 %v930, 32
    %v943 = vpop.permute.xlu0 %942
    %944 = vrot.lane.b32.xlu0 %v933, 32
    %v945 = vpop.permute.xlu0 %944
    %946 = vrot.lane.b32.xlu0 %v939, 32
    %v947 = vpop.permute.xlu0 %946
    %948 = vrot.lane.b32.xlu0 %v941, 32
    %v949 = vpop.permute.xlu0 %948
    %v954 = vsel %vm172, %v880, %v943
    %v955 = vsel %vm172, %v881, %v945
    %v956 = vsel %vm172, %v882, %v947
    %v957 = vsel %vm172, %v883, %v949
    %962 = vrot.lane.b32.xlu0 %v954, 64
    %v963 = vpop.permute.xlu0 %962
    %964 = vrot.lane.b32.xlu0 %v955, 64
    %v965 = vpop.permute.xlu0 %964
    %966 = vrot.lane.b32.xlu0 %v956, 64
    %v967 = vpop.permute.xlu0 %966
    %968 = vrot.lane.b32.xlu0 %v957, 64
    %v969 = vpop.permute.xlu0 %968
    %v974 = vsel %vm382, %v954, %v963
    %v975 = vsel %vm382, %v955, %v965
    %v976 = vsel %vm382, %v956, %v967
    %v977 = vsel %vm382, %v957, %v969
    %v978 = vmul.f32 %v974, %v56
    %v979 = vmul.f32 %v974, %v57
    %v980 = vmul.f32 %v974, %v58
    %v981 = vmul.f32 %v974, %v59
    %v982 = vmul.f32 %v975, %v60
    %v983 = vmul.f32 %v975, %v61
    %v984 = vmul.f32 %v975, %v62
    %v985 = vmul.f32 %v975, %v63
    %v986 = vmul.f32 %v976, %v64
    %v987 = vmul.f32 %v976, %v65
    %v988 = vmul.f32 %v976, %v66
    %v989 = vmul.f32 %v976, %v67
    %v990 = vmul.f32 %v977, %v68
    %v991 = vmul.f32 %v977, %v69
    %v992 = vmul.f32 %v977, %v70
    %v993 = vmul.f32 %v977, %v71
    %v994 = vpack.c.bf16 %v982, %v978
    %v995 = vpack.c.bf16 %v983, %v979
    %v996 = vpack.c.bf16 %v984, %v980
    %v997 = vpack.c.bf16 %v985, %v981
    %v998 = vpack.c.bf16 %v990, %v986
    %v999 = vpack.c.bf16 %v991, %v987
    %v1000 = vpack.c.bf16 %v992, %v988
    %v1001 = vpack.c.bf16 %v993, %v989
    %v1002 = vld [vmem:[%s5] sm:$0xf]
    %v1003 = vld [vmem:[%s5 + $0x4] sm:$0xf]
    %v1004 = vld [vmem:[%s5 + $0x8] sm:$0xf]
    %v1005 = vld [vmem:[%s5 + $0xc] sm:$0xf]
    %v1006 = vld [vmem:[%s5 + $0x10] sm:$0xf]
    %v1007 = vld [vmem:[%s5 + $0x14] sm:$0xf]
    %v1008 = vld [vmem:[%s5 + $0x18] sm:$0xf]
    %v1009 = vld [vmem:[%s5 + $0x1c] sm:$0xf]
    %v1010 = vld [vmem:[%s6] sm:$0xf]
    %v1011 = vld [vmem:[%s6 + $0x4] sm:$0xf]
    %v1012 = vld [vmem:[%s6 + $0x8] sm:$0xf]
    %v1013 = vld [vmem:[%s6 + $0xc] sm:$0xf]
    %v1014 = vld [vmem:[%s6 + $0x10] sm:$0xf]
    %v1015 = vld [vmem:[%s6 + $0x14] sm:$0xf]
    %v1016 = vld [vmem:[%s6 + $0x18] sm:$0xf]
    %v1017 = vld [vmem:[%s6 + $0x1c] sm:$0xf]
    %v1018 = vld [vmem:[%s6 + $0x20] sm:$0xf]
    %v1019 = vld [vmem:[%s6 + $0x24] sm:$0xf]
    %v1020 = vld [vmem:[%s6 + $0x28] sm:$0xf]
    %v1021 = vld [vmem:[%s6 + $0x2c] sm:$0xf]
    %v1022 = vld [vmem:[%s6 + $0x30] sm:$0xf]
    %v1023 = vld [vmem:[%s6 + $0x34] sm:$0xf]
    %v1024 = vld [vmem:[%s6 + $0x38] sm:$0xf]
    %v1025 = vld [vmem:[%s6 + $0x3c] sm:$0xf]
    %v1026 = vld [vmem:[%s6 + $0x40] sm:$0xf]
    %v1027 = vld [vmem:[%s6 + $0x44] sm:$0xf]
    %v1028 = vld [vmem:[%s6 + $0x48] sm:$0xf]
    %v1029 = vld [vmem:[%s6 + $0x4c] sm:$0xf]
    %v1030 = vld [vmem:[%s6 + $0x50] sm:$0xf]
    %v1031 = vld [vmem:[%s6 + $0x54] sm:$0xf]
    %v1032 = vld [vmem:[%s6 + $0x58] sm:$0xf]
    %v1033 = vld [vmem:[%s6 + $0x5c] sm:$0xf]
    %v1034 = vld [vmem:[%s6 + $0x60] sm:$0xf]
    %v1035 = vld [vmem:[%s6 + $0x64] sm:$0xf]
    %v1036 = vld [vmem:[%s6 + $0x68] sm:$0xf]
    %v1037 = vld [vmem:[%s6 + $0x6c] sm:$0xf]
    %v1038 = vld [vmem:[%s6 + $0x70] sm:$0xf]
    %v1039 = vld [vmem:[%s6 + $0x74] sm:$0xf]
    %v1040 = vld [vmem:[%s6 + $0x78] sm:$0xf]
    %v1041 = vld [vmem:[%s6 + $0x7c] sm:$0xf]
    %v1042 = vld [vmem:[%s6 + $0x80] sm:$0xf]
    %v1043 = vld [vmem:[%s6 + $0x84] sm:$0xf]
    %v1044 = vld [vmem:[%s6 + $0x88] sm:$0xf]
    %v1045 = vld [vmem:[%s6 + $0x8c] sm:$0xf]
    %v1046 = vld [vmem:[%s6 + $0x90] sm:$0xf]
    %v1047 = vld [vmem:[%s6 + $0x94] sm:$0xf]
    %v1048 = vld [vmem:[%s6 + $0x98] sm:$0xf]
    %v1049 = vld [vmem:[%s6 + $0x9c] sm:$0xf]
    %v1050 = vld [vmem:[%s6 + $0xa0] sm:$0xf]
    %v1051 = vld [vmem:[%s6 + $0xa4] sm:$0xf]
    %v1052 = vld [vmem:[%s6 + $0xa8] sm:$0xf]
    %v1053 = vld [vmem:[%s6 + $0xac] sm:$0xf]
    %v1054 = vld [vmem:[%s6 + $0xb0] sm:$0xf]
    %v1055 = vld [vmem:[%s6 + $0xb4] sm:$0xf]
    %v1056 = vld [vmem:[%s6 + $0xb8] sm:$0xf]
    %v1057 = vld [vmem:[%s6 + $0xbc] sm:$0xf]
    %v1058 = vld [vmem:[%s6 + $0xc0] sm:$0xf]
    %v1059 = vld [vmem:[%s6 + $0xc4] sm:$0xf]
    %v1060 = vld [vmem:[%s6 + $0xc8] sm:$0xf]
    %v1061 = vld [vmem:[%s6 + $0xcc] sm:$0xf]
    %v1062 = vld [vmem:[%s6 + $0xd0] sm:$0xf]
    %v1063 = vld [vmem:[%s6 + $0xd4] sm:$0xf]
    %v1064 = vld [vmem:[%s6 + $0xd8] sm:$0xf]
    %v1065 = vld [vmem:[%s6 + $0xdc] sm:$0xf]
    %v1066 = vld [vmem:[%s6 + $0xe0] sm:$0xf]
    %v1067 = vld [vmem:[%s6 + $0xe4] sm:$0xf]
    %v1068 = vld [vmem:[%s6 + $0xe8] sm:$0xf]
    %v1069 = vld [vmem:[%s6 + $0xec] sm:$0xf]
    %v1070 = vld [vmem:[%s6 + $0xf0] sm:$0xf]
    %v1071 = vld [vmem:[%s6 + $0xf4] sm:$0xf]
    %v1072 = vld [vmem:[%s6 + $0xf8] sm:$0xf]
    %v1073 = vld [vmem:[%s6 + $0xfc] sm:$0xf]
    %v1138 = vunpack.c.l.b16 %v1010
    %v1139 = vunpack.c.l.b16 %v1011
    %v1140 = vunpack.c.l.b16 %v1012
    %v1141 = vunpack.c.l.b16 %v1013
    %v1142 = vunpack.c.l.b16 %v1014
    %v1143 = vunpack.c.l.b16 %v1015
    %v1144 = vunpack.c.l.b16 %v1016
    %v1145 = vunpack.c.l.b16 %v1017
    %v1146 = vunpack.c.l.b16 %v1018
    %v1147 = vunpack.c.l.b16 %v1019
    %v1148 = vunpack.c.l.b16 %v1020
    %v1149 = vunpack.c.l.b16 %v1021
    %v1150 = vunpack.c.l.b16 %v1022
    %v1151 = vunpack.c.l.b16 %v1023
    %v1152 = vunpack.c.l.b16 %v1024
    %v1153 = vunpack.c.l.b16 %v1025
    %v1154 = vunpack.c.l.b16 %v1026
    %v1155 = vunpack.c.l.b16 %v1027
    %v1156 = vunpack.c.l.b16 %v1028
    %v1157 = vunpack.c.l.b16 %v1029
    %v1158 = vunpack.c.l.b16 %v1030
    %v1159 = vunpack.c.l.b16 %v1031
    %v1160 = vunpack.c.l.b16 %v1032
    %v1161 = vunpack.c.l.b16 %v1033
    %v1162 = vunpack.c.l.b16 %v1034
    %v1163 = vunpack.c.l.b16 %v1035
    %v1164 = vunpack.c.l.b16 %v1036
    %v1165 = vunpack.c.l.b16 %v1037
    %v1166 = vunpack.c.l.b16 %v1038
    %v1167 = vunpack.c.l.b16 %v1039
    %v1168 = vunpack.c.l.b16 %v1040
    %v1169 = vunpack.c.l.b16 %v1041
    %v1170 = vunpack.c.l.b16 %v1042
    %v1171 = vunpack.c.l.b16 %v1043
    %v1172 = vunpack.c.l.b16 %v1044
    %v1173 = vunpack.c.l.b16 %v1045
    %v1174 = vunpack.c.l.b16 %v1046
    %v1175 = vunpack.c.l.b16 %v1047
    %v1176 = vunpack.c.l.b16 %v1048
    %v1177 = vunpack.c.l.b16 %v1049
    %v1178 = vunpack.c.l.b16 %v1050
    %v1179 = vunpack.c.l.b16 %v1051
    %v1180 = vunpack.c.l.b16 %v1052
    %v1181 = vunpack.c.l.b16 %v1053
    %v1182 = vunpack.c.l.b16 %v1054
    %v1183 = vunpack.c.l.b16 %v1055
    %v1184 = vunpack.c.l.b16 %v1056
    %v1185 = vunpack.c.l.b16 %v1057
    %v1186 = vunpack.c.l.b16 %v1058
    %v1187 = vunpack.c.l.b16 %v1059
    %v1188 = vunpack.c.l.b16 %v1060
    %v1189 = vunpack.c.l.b16 %v1061
    %v1190 = vunpack.c.l.b16 %v1062
    %v1191 = vunpack.c.l.b16 %v1063
    %v1192 = vunpack.c.l.b16 %v1064
    %v1193 = vunpack.c.l.b16 %v1065
    %v1194 = vunpack.c.l.b16 %v1066
    %v1195 = vunpack.c.l.b16 %v1067
    %v1196 = vunpack.c.l.b16 %v1068
    %v1197 = vunpack.c.l.b16 %v1069
    %v1198 = vunpack.c.l.b16 %v1070
    %v1199 = vunpack.c.l.b16 %v1071
    %v1200 = vunpack.c.l.b16 %v1072
    %v1201 = vunpack.c.l.b16 %v1073
    %v1202 = vpack.c.b16 %v1139, %v1138
    %v1203 = vpack.c.b16 %v1141, %v1140
    %v1204 = vpack.c.b16 %v1143, %v1142
    %v1205 = vpack.c.b16 %v1145, %v1144
    %v1206 = vpack.c.b16 %v1147, %v1146
    %v1207 = vpack.c.b16 %v1149, %v1148
    %v1208 = vpack.c.b16 %v1151, %v1150
    %v1209 = vpack.c.b16 %v1153, %v1152
    %v1210 = vpack.c.b16 %v1155, %v1154
    %v1211 = vpack.c.b16 %v1157, %v1156
    %v1212 = vpack.c.b16 %v1159, %v1158
    %v1213 = vpack.c.b16 %v1161, %v1160
    %v1214 = vpack.c.b16 %v1163, %v1162
    %v1215 = vpack.c.b16 %v1165, %v1164
    %v1216 = vpack.c.b16 %v1167, %v1166
    %v1217 = vpack.c.b16 %v1169, %v1168
    %v1218 = vpack.c.b16 %v1171, %v1170
    %v1219 = vpack.c.b16 %v1173, %v1172
    %v1220 = vpack.c.b16 %v1175, %v1174
    %v1221 = vpack.c.b16 %v1177, %v1176
    %v1222 = vpack.c.b16 %v1179, %v1178
    %v1223 = vpack.c.b16 %v1181, %v1180
    %v1224 = vpack.c.b16 %v1183, %v1182
    %v1225 = vpack.c.b16 %v1185, %v1184
    %v1226 = vpack.c.b16 %v1187, %v1186
    %v1227 = vpack.c.b16 %v1189, %v1188
    %v1228 = vpack.c.b16 %v1191, %v1190
    %v1229 = vpack.c.b16 %v1193, %v1192
    %v1230 = vpack.c.b16 %v1195, %v1194
    %v1231 = vpack.c.b16 %v1197, %v1196
    %v1232 = vpack.c.b16 %v1199, %v1198
    %v1233 = vpack.c.b16 %v1201, %v1200
    %1266 = vmatprep.subr.bf16.mxu0 0
    %1267 = vmatpush1.bf16.msra.mxu0 %v1209
    %1268 = vmatprep.subr.bf16.mxu0 0
    %1269 = vmatpush1.bf16.msra.mxu0 %v1208
    %1270 = vmatprep.subr.bf16.mxu0 0
    %1271 = vmatpush1.bf16.msra.mxu0 %v1207
    %1272 = vmatprep.subr.bf16.mxu0 0
    %1273 = vmatpush1.bf16.msra.mxu0 %v1206
    %1274 = vmatprep.subr.bf16.mxu0 0
    %1275 = vmatpush1.bf16.msra.mxu0 %v1205
    %1276 = vmatprep.subr.bf16.mxu0 0
    %1277 = vmatpush1.bf16.msra.mxu0 %v1204
    %1278 = vmatprep.subr.bf16.mxu0 0
    %1279 = vmatpush1.bf16.msra.mxu0 %v1203
    %1280 = vmatprep.subr.bf16.mxu0 0
    %1281 = vmatpush1.bf16.msra.mxu0 %v1202
    %1282 = vmatprep.subr.bf16.mxu0 0
    %1283 = vmatpush2.bf16.msra.mxu0 %v1217
    %1284 = vmatprep.subr.bf16.mxu0 0
    %1285 = vmatpush2.bf16.msra.mxu0 %v1216
    %1286 = vmatprep.subr.bf16.mxu0 0
    %1287 = vmatpush2.bf16.msra.mxu0 %v1215
    %1288 = vmatprep.subr.bf16.mxu0 0
    %1289 = vmatpush2.bf16.msra.mxu0 %v1214
    %1290 = vmatprep.subr.bf16.mxu0 0
    %1291 = vmatpush2.bf16.msra.mxu0 %v1213
    %1292 = vmatprep.subr.bf16.mxu0 0
    %1293 = vmatpush2.bf16.msra.mxu0 %v1212
    %1294 = vmatprep.subr.bf16.mxu0 0
    %1295 = vmatpush2.bf16.msra.mxu0 %v1211
    %1296 = vmatprep.subr.bf16.mxu0 0
    %1297 = vmatpush2.bf16.msra.mxu0 %v1210
    %1298 = vmatprep.mubr.bf16.mxu0 %v995
    %1299 = vmatmul.mubr.bf16.gmra.mxu0 %v994
    %v1300 = vpop.f32.mrf.mxu0
    %v1301 = vadd.f32 0.0, %v1300
    %v1302 = vpop.f32.mrf.mxu0
    %v1303 = vpop.f32.mrf.mxu0
    %v1304 = vadd.f32 0.0, %v1303
    %v1305 = vpop.f32.mrf.mxu0
    %1306 = vmatprep.mubr.bf16.mxu0 %v999
    %1307 = vmatmul.mubr.bf16.gmra.mxu0 %v998
    %v1308 = vpop.f32.mrf.mxu0
    %v1309 = vadd.f32 0.0, %v1308
    %v1310 = vpop.f32.mrf.mxu0
    %v1311 = vpop.f32.mrf.mxu0
    %v1312 = vadd.f32 0.0, %v1311
    %v1313 = vpop.f32.mrf.mxu0
    %1314 = vdwg.mxu0
    %1315 = vmatprep.subr.bf16.mxu0 0
    %1316 = vmatpush1.bf16.msra.mxu0 %v1225
    %1317 = vmatprep.subr.bf16.mxu0 0
    %1318 = vmatpush1.bf16.msra.mxu0 %v1224
    %1319 = vmatprep.subr.bf16.mxu0 0
    %1320 = vmatpush1.bf16.msra.mxu0 %v1223
    %1321 = vmatprep.subr.bf16.mxu0 0
    %1322 = vmatpush1.bf16.msra.mxu0 %v1222
    %1323 = vmatprep.subr.bf16.mxu0 0
    %1324 = vmatpush1.bf16.msra.mxu0 %v1221
    %1325 = vmatprep.subr.bf16.mxu0 0
    %1326 = vmatpush1.bf16.msra.mxu0 %v1220
    %1327 = vmatprep.subr.bf16.mxu0 0
    %1328 = vmatpush1.bf16.msra.mxu0 %v1219
    %1329 = vmatprep.subr.bf16.mxu0 0
    %1330 = vmatpush1.bf16.msra.mxu0 %v1218
    %1331 = vmatprep.subr.bf16.mxu0 0
    %1332 = vmatpush2.bf16.msra.mxu0 %v1233
    %1333 = vmatprep.subr.bf16.mxu0 0
    %1334 = vmatpush2.bf16.msra.mxu0 %v1232
    %1335 = vmatprep.subr.bf16.mxu0 0
    %1336 = vmatpush2.bf16.msra.mxu0 %v1231
    %1337 = vmatprep.subr.bf16.mxu0 0
    %1338 = vmatpush2.bf16.msra.mxu0 %v1230
    %1339 = vmatprep.subr.bf16.mxu0 0
    %1340 = vmatpush2.bf16.msra.mxu0 %v1229
    %1341 = vmatprep.subr.bf16.mxu0 0
    %1342 = vmatpush2.bf16.msra.mxu0 %v1228
    %1343 = vmatprep.subr.bf16.mxu0 0
    %1344 = vmatpush2.bf16.msra.mxu0 %v1227
    %1345 = vmatprep.subr.bf16.mxu0 0
    %1346 = vmatpush2.bf16.msra.mxu0 %v1226
    %1347 = vmatprep.mubr.bf16.mxu0 %v997
    %1348 = vmatmul.mubr.bf16.gmra.mxu0 %v996
    %v1349 = vpop.f32.mrf.mxu0
    %v1350 = vadd.f32 %v1301, %v1349
    %v1351 = vpop.f32.mrf.mxu0
    %v1352 = vpop.f32.mrf.mxu0
    %v1353 = vadd.f32 %v1304, %v1352
    %v1354 = vpop.f32.mrf.mxu0
    %1355 = vmatprep.mubr.bf16.mxu0 %v1001
    %1356 = vmatmul.mubr.bf16.gmra.mxu0 %v1000
    %v1357 = vpop.f32.mrf.mxu0
    %v1358 = vadd.f32 %v1309, %v1357
    %v1359 = vpop.f32.mrf.mxu0
    %v1360 = vpop.f32.mrf.mxu0
    %v1361 = vadd.f32 %v1312, %v1360
    %v1362 = vpop.f32.mrf.mxu0
    %1363 = vdwg.mxu0
    %v1372 = vunpack.c.l.b16 %v1002
    %v1373 = vunpack.c.l.b16 %v1003
    %v1374 = vunpack.c.l.b16 %v1004
    %v1375 = vunpack.c.l.b16 %v1005
    %v1376 = vunpack.c.l.b16 %v1006
    %v1377 = vunpack.c.l.b16 %v1007
    %v1378 = vunpack.c.l.b16 %v1008
    %v1379 = vunpack.c.l.b16 %v1009
    %v1380 = vpack.c.b16 %v1373, %v1372
    %v1381 = vpack.c.b16 %v1375, %v1374
    %v1382 = vpack.c.b16 %v1377, %v1376
    %v1383 = vpack.c.b16 %v1379, %v1378
    %1388 = vmatprep.subr.bf16.mxu0 0
    %1389 = vmatpush1.bf16.msra.mxu0 0
    %1390 = vmatprep.subr.bf16.mxu0 0
    %1391 = vmatpush1.bf16.msra.mxu0 0
    %1392 = vmatprep.subr.bf16.mxu0 0
    %1393 = vmatpush1.bf16.msra.mxu0 0
    %1394 = vmatprep.subr.bf16.mxu0 0
    %1395 = vmatpush1.bf16.msra.mxu0 0
    %1396 = vmatprep.subr.bf16.mxu0 0
    %1397 = vmatpush1.bf16.msra.mxu0 %v1383
    %1398 = vmatprep.subr.bf16.mxu0 0
    %1399 = vmatpush1.bf16.msra.mxu0 %v1382
    %1400 = vmatprep.subr.bf16.mxu0 0
    %1401 = vmatpush1.bf16.msra.mxu0 %v1381
    %1402 = vmatprep.subr.bf16.mxu0 0
    %1403 = vmatpush1.bf16.msra.mxu0 %v1380
    %1404 = vmatprep.subr.bf16.mxu0 0
    %1405 = vmatpush2.bf16.msra.mxu0 0
    %1406 = vmatprep.subr.bf16.mxu0 0
    %1407 = vmatpush2.bf16.msra.mxu0 0
    %1408 = vmatprep.subr.bf16.mxu0 0
    %1409 = vmatpush2.bf16.msra.mxu0 0
    %1410 = vmatprep.subr.bf16.mxu0 0
    %1411 = vmatpush2.bf16.msra.mxu0 0
    %1412 = vmatprep.subr.bf16.mxu0 0
    %1413 = vmatpush2.bf16.msra.mxu0 0
    %1414 = vmatprep.subr.bf16.mxu0 0
    %1415 = vmatpush2.bf16.msra.mxu0 0
    %1416 = vmatprep.subr.bf16.mxu0 0
    %1417 = vmatpush2.bf16.msra.mxu0 0
    %1418 = vmatprep.subr.bf16.mxu0 0
    %1419 = vmatpush2.bf16.msra.mxu0 0
    %1420 = vmatprep.mubr.bf16.mxu0 0
    %1421 = vmatmul.mubr.bf16.gmra.mxu0 %v798
    %v1422 = vpop.f32.mrf.mxu0
    %v1423 = vadd.f32 %v1350, %v1422
    %v1424 = vpop.f32.mrf.mxu0
    %v1425 = vpop.f32.mrf.mxu0
    %v1426 = vadd.f32 %v1353, %v1425
    %v1427 = vpop.f32.mrf.mxu0
    %1428 = vmatprep.mubr.bf16.mxu0 0
    %1429 = vmatmul.mubr.bf16.gmra.mxu0 %v801
    %v1430 = vpop.f32.mrf.mxu0
    %v1431 = vadd.f32 %v1358, %v1430
    %v1432 = vpop.f32.mrf.mxu0
    %v1433 = vpop.f32.mrf.mxu0
    %v1434 = vadd.f32 %v1361, %v1433
    %v1435 = vpop.f32.mrf.mxu0
    %1436 = vdwg.mxu0
    %v1437 = vadd.f32 %v1423, %v76
    %v1438 = vadd.f32 %v1426, %v77
    %v1439 = vadd.f32 %v1431, %v78
    %v1440 = vadd.f32 %v1434, %v79
    %v1441 = vtanh.pop %v1437
    %v1442 = vtanh.pop %v1438
    %v1443 = vtanh.pop %v1439
    %v1444 = vtanh.pop %v1440
    %1447 = vrot.lane.b32.xlu0 %v45, 32
    %v1448 = vpop.permute.xlu0 %1447
    %1449 = vrot.lane.b32.xlu0 %v46, 32
    %v1450 = vpop.permute.xlu0 %1449
    %v1453 = vmul.f32 %v873, %v1448
    %v1454 = vmul.f32 %v875, %v1450
    %v1455 = vmul.f32 %v877, %v167
    %v1456 = vmul.f32 %v879, %v169
    %v1457 = vsub.f32 1.0, %v873
    %v1458 = vsub.f32 1.0, %v875
    %v1459 = vsub.f32 1.0, %v877
    %v1460 = vsub.f32 1.0, %v879
    %1465 = vrot.lane.b32.xlu0 %v1441, 32
    %v1466 = vpop.permute.xlu0 %1465
    %1467 = vrot.lane.b32.xlu0 %v1442, 32
    %v1468 = vpop.permute.xlu0 %1467
    %1469 = vrot.lane.b32.xlu0 %v1443, 32
    %v1470 = vpop.permute.xlu0 %1469
    %1471 = vrot.lane.b32.xlu0 %v1444, 32
    %v1472 = vpop.permute.xlu0 %1471
    %v1477 = vmul.f32 %v1457, %v1466
    %v1478 = vmul.f32 %v1458, %v1468
    %v1479 = vmul.f32 %v1459, %v1470
    %v1480 = vmul.f32 %v1460, %v1472
    %v1481 = vadd.f32 %v1453, %v1477
    %v1482 = vadd.f32 %v1454, %v1478
    %v1483 = vadd.f32 %v1455, %v1479
    %v1484 = vadd.f32 %v1456, %v1480
    %1487 = vrot.lane.b32.xlu0 %v1481, 96
    %v1488 = vpop.permute.xlu0 %1487
    %1489 = vrot.lane.b32.xlu0 %v1482, 96
    %v1490 = vpop.permute.xlu0 %1489
    %1493 = vst.msk [vmem:[#allocation2] sm:$0xff] %vm172, %v1488
    %1494 = vst.msk [vmem:[#allocation2 + $0x8] sm:$0xff] %vm172, %v1490
    %1497 = vrot.lane.b32.xlu0 %v1483, 96
    %v1498 = vpop.permute.xlu0 %1497
    %1499 = vrot.lane.b32.xlu0 %v1484, 96
    %v1500 = vpop.permute.xlu0 %1499
    %s1503 = scalar_lea.vmem [#allocation2], 16
    %1504 = vst.msk [vmem:[%s1503] sm:$0xff] %vm172, %v1498
    %1505 = vst.msk [vmem:[%s1503 + $0x8] sm:$0xff] %vm172, %v1500
    // Predicated region
    $region46: #{tpu_custom_call.1} parent=1 // pred_check
      _
    $region47: #{tpu_custom_call.1} parent=1 // pred_check_branch
      %1507 = sbr.rel (0) target = $region49
    $region48: #{tpu_custom_call.1} parent=1 // pred_region
      %s1509 = ssub.s32 512, 512
      %1510 = vsyncadd [#allocation3], %s1509
      %s1511 = sshll.u32 [#allocation2], 4
      %s1512 = int_to_ptr.vmem [resolvable:$true] %s1511
      %1517 = dma.vmem_to_hbm [thread:$0]  %s1512, 512, %s11, [#allocation3], 128, 128, 8
    $region49: #{tpu_custom_call.1} parent=1 // pred_fallthru
      _
    // Predicated region
    $region50: #{tpu_custom_call.1} parent=1 // pred_check
      _
    $region51: #{tpu_custom_call.1} parent=1 // pred_check_branch
      %1519 = sbr.rel (0) target = $region53
    $region52: #{tpu_custom_call.1} parent=1 // pred_region
      %1520 = dma.done [#allocation3], 512
    $region53: #{tpu_custom_call.1} parent=1 // pred_fallthru
      _
    %1521 = vsyncpa [#allocation3], 1

</llo_original>
